<compile_context>
chip_gen: v7x
topology: tpu7x:2x2x1
jax: 0.10.0
libtpu: 0.0.40
codegen_flags: <defaults>
</compile_context>

<pallas_src>
import functools

import jax
import jax.numpy as jnp
import numpy as np
from jax.experimental import pallas as pl
from jax.experimental.pallas import tpu as pltpu


_MAX_FUSED_UNROLL_D = 128   # cap on the static-unroll length inside the fused kernel


def _vmem_capacity_bytes():
    try:
        info = pltpu.get_tpu_info()
        cap = getattr(info, "vmem_capacity_bytes", None)
        if cap:
            return int(cap)
    except Exception:
        pass
    return 64 * 1024 * 1024   # conservative fallback (v7x per-TensorCore VMEM)


def _pooling_matrices(H, W):
    """Constant 0/1 matrices mapping the flattened HW lane axis <-> H and W."""
    k = jnp.arange(H * W, dtype=jnp.int32)
    hh = jnp.arange(H, dtype=jnp.int32)
    ww = jnp.arange(W, dtype=jnp.int32)
    a_h = (k[:, None] // W == hh[None, :]).astype(jnp.float32)    # (HW, H)
    a_w = (k[:, None] % W == ww[None, :]).astype(jnp.float32)     # (HW, W)
    b_h = (hh[:, None] == k[None, :] // W).astype(jnp.float32)    # (H, HW)
    b_w = (ww[:, None] == k[None, :] % W).astype(jnp.float32)     # (W, HW)
    return a_h, a_w, b_h, b_w


def _gate_block(x2d, zhw, w1, w2, b2, inv_hw):
    """Gate one dense (C, HW) block given the (Cr, HW) h/w excitation map."""
    # Per-d (H,W)-mean recomputed from data already in VMEM (f32 accumulation,
    # no full-tile upcast of x).
    mean_hw = jnp.sum(x2d, axis=1, keepdims=True, dtype=jnp.float32) * inv_hw   # (C, 1)
    zd = jnp.dot(w1, mean_hw, preferred_element_type=jnp.float32)               # (Cr, 1)
    z = jnp.maximum(zd + zhw, 0.0)                                              # (Cr, HW)
    g = jax.nn.sigmoid(
        jnp.dot(w2, z, preferred_element_type=jnp.float32) + b2)                # (C, HW)
    return x2d * g.astype(x2d.dtype)


# ---------------------------------------------------------------------------
# Fused single-pass kernel: whole (C, D, HW) slab of one batch element in VMEM.
# ---------------------------------------------------------------------------
def _fused_kernel(x_ref, ah_ref, aw_ref, bh_ref, bw_ref,
                  w1_ref, b1_ref, w2_ref, b2_ref, o_ref, *, d, h, w):
    c, _, hw = x_ref.shape
    w1 = w1_ref[...]
    w2 = w2_ref[...]
    b1 = b1_ref[...].astype(jnp.float32)
    b2 = b2_ref[...].astype(jnp.float32)

    # Phase 1: lane-dense reduction over D (f32 accumulation, per-slice loads).
    sum_d = jnp.zeros((c, hw), jnp.float32)
    for di in range(d):
        sum_d = sum_d + x_ref[:, di, :].astype(jnp.float32)

    mean_dw = jnp.dot(sum_d, ah_ref[...],
                      preferred_element_type=jnp.float32) * (1.0 / (d * w))     # (C, H)
    mean_dh = jnp.dot(sum_d, aw_ref[...],
                      preferred_element_type=jnp.float32) * (1.0 / (d * h))     # (C, W)
    zh = jnp.dot(w1, mean_dw, preferred_element_type=jnp.float32)               # (Cr, H)
    zw = jnp.dot(w1, mean_dh, preferred_element_type=jnp.float32)               # (Cr, W)
    zhw = (jnp.dot(zh, bh_ref[...], preferred_element_type=jnp.float32)
           + jnp.dot(zw, bw_ref[...], preferred_element_type=jnp.float32)
           + b1)                                                                # (Cr, HW)

    # Phase 2: per-d gating straight out of the VMEM-resident slab.
    inv_hw = 1.0 / hw
    for di in range(d):
        o_ref[:, di, :] = _gate_block(x_ref[:, di, :], zhw, w1, w2, b2, inv_hw)


# ---------------------------------------------------------------------------
# Two-pass fallback, pass 1: reduce over D, emit zhw[b, r, h*W+w].
# ---------------------------------------------------------------------------
def _pool_kernel(x_ref, ah_ref, aw_ref, bh_ref, bw_ref, w1_ref, b1_ref,
                 zhw_ref, accd_ref, *, d_total, h, w):
    d_i = pl.program_id(1)

    @pl.when(d_i == 0)
    def _():
        accd_ref[...] = jnp.zeros_like(accd_ref)

    # Lane-dense running sum over D, accumulated in f32.
    accd_ref[...] += jnp.sum(x_ref[...], axis=1, dtype=jnp.float32)             # (C, HW)

    @pl.when(d_i == pl.num_programs(1) - 1)
    def _():
        w1 = w1_ref[...]
        b1 = b1_ref[...].astype(jnp.float32)
        sum_d = accd_ref[...]
        mean_dw = jnp.dot(sum_d, ah_ref[...],
                          preferred_element_type=jnp.float32) * (1.0 / (d_total * w))
        mean_dh = jnp.dot(sum_d, aw_ref[...],
                          preferred_element_type=jnp.float32) * (1.0 / (d_total * h))
        zh = jnp.dot(w1, mean_dw, preferred_element_type=jnp.float32)
        zw = jnp.dot(w1, mean_dh, preferred_element_type=jnp.float32)
        zhw_ref[...] = (jnp.dot(zh, bh_ref[...], preferred_element_type=jnp.float32)
                        + jnp.dot(zw, bw_ref[...], preferred_element_type=jnp.float32)
                        + b1)


# ---------------------------------------------------------------------------
# Two-pass fallback, pass 2: fully parallel gating over (batch, D).
# ---------------------------------------------------------------------------
def _gate_kernel(x_ref, zhw_ref, w1_ref, w2_ref, b2_ref, o_ref, *, hw):
    o_ref[...] = _gate_block(x_ref[...], zhw_ref[...], w1_ref[...], w2_ref[...],
                             b2_ref[...].astype(jnp.float32), 1.0 / hw)


def project_excite(x, w1, b1, w2, b2, *, force_two_pass=False, tile_d=None):
    """ProjectExciteLayer forward.

    x: (B, C, D, H, W); w1: (Cr, C); b1: (Cr,); w2: (C, Cr); b2: (C,).
    """
    B, C, D, H, W = x.shape
    Cr = w1.shape[0]
    HW = H * W
    itemsize = jnp.dtype(x.dtype).itemsize

    a_h, a_w, b_h, b_w = _pooling_matrices(H, W)
    b1c = jnp.asarray(b1).reshape(Cr, 1)
    b2c = jnp.asarray(b2).reshape(C, 1)
    x_flat = x.reshape(B, C, D, HW)         # lane-dense view (contiguous -> free)

    # --- generation-aware VMEM budgets -------------------------------------
    cap = _vmem_capacity_bytes()
    vmem_limit = int(min(cap * 3 // 4, 96 * 1024 * 1024))      # 96M on 128M parts, 48M on v7x
    pool_mat_bytes = 2 * 4 * HW * (H + W)
    weight_bytes = 4 * (2 * C * Cr + C + Cr)
    slab_bytes = C * D * HW * itemsize

    # Fused path budget: double-buffered input+output slabs + resident constants
    # + f32 temporaries (zhw / z / g) + slack.
    fused_bytes = (4 * slab_bytes + pool_mat_bytes + weight_bytes
                   + 3 * (C + Cr) * HW * 4 + (2 << 20))
    use_fused = ((not force_two_pass)
                 and fused_bytes <= vmem_limit
                 and D <= _MAX_FUSED_UNROLL_D)

    if use_fused:
        out_flat = pl.pallas_call(
            functools.partial(_fused_kernel, d=D, h=H, w=W),
            out_shape=jax.ShapeDtypeStruct((B, C, D, HW), x.dtype),
            grid_spec=pltpu.PrefetchScalarGridSpec(
                num_scalar_prefetch=0,
                grid=(B,),
                in_specs=[
                    pl.BlockSpec((None, C, D, HW), lambda b: (b, 0, 0, 0)),
                    pl.BlockSpec((HW, H), lambda b: (0, 0)),
                    pl.BlockSpec((HW, W), lambda b: (0, 0)),
                    pl.BlockSpec((H, HW), lambda b: (0, 0)),
                    pl.BlockSpec((W, HW), lambda b: (0, 0)),
                    pl.BlockSpec((Cr, C), lambda b: (0, 0)),
                    pl.BlockSpec((Cr, 1), lambda b: (0, 0)),
                    pl.BlockSpec((C, Cr), lambda b: (0, 0)),
                    pl.BlockSpec((C, 1), lambda b: (0, 0)),
                ],
                out_specs=pl.BlockSpec((None, C, D, HW), lambda b: (b, 0, 0, 0)),
            ),
            compiler_params=pltpu.CompilerParams(
                dimension_semantics=("parallel",),
                vmem_limit_bytes=vmem_limit),
        )(x_flat, a_h, a_w, b_h, b_w, w1, b1c, w2, b2c)
        return out_flat.reshape(B, C, D, H, W)

    # ----- two-pass fallback -------------------------------------------------
    if tile_d is None:
        fixed = (pool_mat_bytes + weight_bytes + C * HW * 4 + 2 * Cr * HW * 4
                 + (1 << 20))
        per_buf = max(min((vmem_limit - fixed) // 2, vmem_limit // 8), 1)
        per_d_bytes = C * HW * itemsize
        cands = [t for t in range(1, D + 1)
                 if D % t == 0 and (t == D or t % 8 == 0)]
        fitting = [t for t in cands if t * per_d_bytes <= per_buf]
        tile_d = max(fitting) if fitting else min(cands)
    assert D % tile_d == 0 and (tile_d == D or tile_d % 8 == 0)
    n_d = D // tile_d

    # Pass 1: lane-dense reduction over D -> per-(h,w) excitation map zhw.
    zhw = pl.pallas_call(
        functools.partial(_pool_kernel, d_total=D, h=H, w=W),
        out_shape=jax.ShapeDtypeStruct((B, Cr, HW), jnp.float32),
        grid_spec=pltpu.PrefetchScalarGridSpec(
            num_scalar_prefetch=0,
            grid=(B, n_d),
            in_specs=[
                pl.BlockSpec((None, C, tile_d, HW), lambda b, d: (b, 0, d, 0)),
                pl.BlockSpec((HW, H), lambda b, d: (0, 0)),
                pl.BlockSpec((HW, W), lambda b, d: (0, 0)),
                pl.BlockSpec((H, HW), lambda b, d: (0, 0)),
                pl.BlockSpec((W, HW), lambda b, d: (0, 0)),
                pl.BlockSpec((Cr, C), lambda b, d: (0, 0)),
                pl.BlockSpec((Cr, 1), lambda b, d: (0, 0)),
            ],
            out_specs=pl.BlockSpec((None, Cr, HW), lambda b, d: (b, 0, 0)),
            scratch_shapes=[pltpu.VMEM((C, HW), jnp.float32)],
        ),
        compiler_params=pltpu.CompilerParams(
            dimension_semantics=("parallel", "arbitrary"),
            vmem_limit_bytes=vmem_limit),
    )(x_flat, a_h, a_w, b_h, b_w, w1, b1c)

    # Pass 2: gating; each grid step handles one dense (C, HW) slice.
    out_flat = pl.pallas_call(
        functools.partial(_gate_kernel, hw=HW),
        out_shape=jax.ShapeDtypeStruct((B, C, D, HW), x.dtype),
        grid_spec=pltpu.PrefetchScalarGridSpec(
            num_scalar_prefetch=0,
            grid=(B, D),
            in_specs=[
                pl.BlockSpec((None, C, None, HW), lambda b, d: (b, 0, d, 0)),
                pl.BlockSpec((None, Cr, HW), lambda b, d: (b, 0, 0)),
                pl.BlockSpec((Cr, C), lambda b, d: (0, 0)),
                pl.BlockSpec((C, Cr), lambda b, d: (0, 0)),
                pl.BlockSpec((C, 1), lambda b, d: (0, 0)),
            ],
            out_specs=pl.BlockSpec((None, C, None, HW), lambda b, d: (b, 0, d, 0)),
        ),
        compiler_params=pltpu.CompilerParams(
            dimension_semantics=("parallel", "parallel"),
            vmem_limit_bytes=vmem_limit),
    )(x_flat, zhw, w1, w2, b2c)

    return out_flat.reshape(B, C, D, H, W)


def project_excite_ref(x, w1, b1, w2, b2):
    """Pure-JAX reference mirroring the PyTorch forward."""
    sq_w = jnp.mean(x, axis=(2, 3), keepdims=True)       # (B,C,1,1,W)
    sq_h = jnp.mean(x, axis=(2, 4), keepdims=True)       # (B,C,1,H,1)
    sq_d = jnp.mean(x, axis=(3, 4), keepdims=True)       # (B,C,D,1,1)
    s = sq_w + sq_h + sq_d                                # (B,C,D,H,W)
    z = jnp.einsum('rc,bcdhw->brdhw', w1, s) + b1[None, :, None, None, None]
    z = jnp.maximum(z, 0.0)
    g = jnp.einsum('cr,brdhw->bcdhw', w2, z) + b2[None, :, None, None, None]
    return x * jax.nn.sigmoid(g)


def _make_inputs(key, B, C, D, H, W, reduction_ratio=2):
    Cr = max(C // reduction_ratio, 1)
    kx, k1, k2, k3, k4 = jax.random.split(key, 5)
    x = jax.random.normal(kx, (B, C, D, H, W), dtype=jnp.float32)
    # conv_c : Conv3d(C -> Cr, kernel 1) == weight (Cr, C), bias (Cr,)
    w1 = jax.random.normal(k1, (Cr, C), dtype=jnp.float32) * 0.5
    b1 = jax.random.normal(k2, (Cr,), dtype=jnp.float32) * 0.1
    # conv_cT : Conv3d(Cr -> C, kernel 1) == weight (C, Cr), bias (C,)
    w2 = jax.random.normal(k3, (C, Cr), dtype=jnp.float32) * 0.5
    b2 = jax.random.normal(k4, (C,), dtype=jnp.float32) * 0.1
    return x, w1, b1, w2, b2


def _check(name, out, ref, rtol=1e-5, atol=1e-5):
    out = np.asarray(jax.block_until_ready(out))
    ref = np.asarray(ref)
    if not np.allclose(out, ref, rtol=rtol, atol=atol):
        err = float(np.max(np.abs(out - ref)))
        raise AssertionError(f"{name}: mismatch vs reference (max abs err {err})")


if __name__ == "__main__":
    key = jax.random.PRNGKey(0)
    k1, k2, k3 = jax.random.split(key, 3)

    # 1) fused single-pass path.
    x, w1, b1, w2, b2 = _make_inputs(k1, B=2, C=4, D=4, H=8, W=16)
    _check("fused", project_excite(x, w1, b1, w2, b2),
           project_excite_ref(x, w1, b1, w2, b2))

    # 2) two-pass fallback (forced), exercising a multi-step D reduction.
    x, w1, b1, w2, b2 = _make_inputs(k2, B=2, C=4, D=16, H=8, W=16)
    _check("two_pass",
           project_excite(x, w1, b1, w2, b2, force_two_pass=True, tile_d=8),
           project_excite_ref(x, w1, b1, w2, b2))

    # 3) fused path with W < 128 / HW not a multiple of 128 (masked lanes).
    x, w1, b1, w2, b2 = _make_inputs(k3, B=1, C=8, D=8, H=8, W=12)
    _check("fused_narrow", project_excite(x, w1, b1, w2, b2),
           project_excite_ref(x, w1, b1, w2, b2))

    print("KERNEL_OK")
</pallas_src>

<mosaic_0001>
module attributes {stable_mosaic.version = 11 : i64} {
  func.func @_fused_kernel(%arg0: i32, %arg1: memref<1x4x4x128xf32, #tpu.memory_space<vmem>>, %arg2: memref<128x8xf32, #tpu.memory_space<vmem>>, %arg3: memref<128x16xf32, #tpu.memory_space<vmem>>, %arg4: memref<8x128xf32, #tpu.memory_space<vmem>>, %arg5: memref<16x128xf32, #tpu.memory_space<vmem>>, %arg6: memref<2x4xf32, #tpu.memory_space<vmem>>, %arg7: memref<2x1xf32, #tpu.memory_space<vmem>>, %arg8: memref<4x2xf32, #tpu.memory_space<vmem>>, %arg9: memref<4x1xf32, #tpu.memory_space<vmem>>, %arg10: memref<1x4x4x128xf32, #tpu.memory_space<vmem>>) attributes {dimension_semantics = [#tpu.dimension_semantics<parallel>], iteration_bounds = array<i64: 2>, scalar_prefetch = 0 : i64, scratch_operands = 0 : i64, tpu.core_type = #tpu.core_type<tc>, window_params = [{transform_indices = @transform_0, window_bounds = array<i64: 1, 4, 4, 128>}, {pipeline_mode = #tpu.pipeline_mode<synchronous>, transform_indices = @transform_1, window_bounds = array<i64: 128, 8>}, {pipeline_mode = #tpu.pipeline_mode<synchronous>, transform_indices = @transform_2, window_bounds = array<i64: 128, 16>}, {pipeline_mode = #tpu.pipeline_mode<synchronous>, transform_indices = @transform_3, window_bounds = array<i64: 8, 128>}, {pipeline_mode = #tpu.pipeline_mode<synchronous>, transform_indices = @transform_4, window_bounds = array<i64: 16, 128>}, {pipeline_mode = #tpu.pipeline_mode<synchronous>, transform_indices = @transform_5, window_bounds = array<i64: 2, 4>}, {pipeline_mode = #tpu.pipeline_mode<synchronous>, transform_indices = @transform_6, window_bounds = array<i64: 2, 1>}, {pipeline_mode = #tpu.pipeline_mode<synchronous>, transform_indices = @transform_7, window_bounds = array<i64: 4, 2>}, {pipeline_mode = #tpu.pipeline_mode<synchronous>, transform_indices = @transform_8, window_bounds = array<i64: 4, 1>}, {transform_indices = @transform_9, window_bounds = array<i64: 1, 4, 4, 128>}]} {
    %c0 = arith.constant 0 : index
    %c0_0 = arith.constant 0 : index
    %0 = vector.load %arg6[%c0, %c0_0] : memref<2x4xf32, #tpu.memory_space<vmem>>, vector<2x4xf32>
    %c0_1 = arith.constant 0 : index
    %c0_2 = arith.constant 0 : index
    %1 = vector.load %arg8[%c0_1, %c0_2] : memref<4x2xf32, #tpu.memory_space<vmem>>, vector<4x2xf32>
    %c0_3 = arith.constant 0 : index
    %c0_4 = arith.constant 0 : index
    %2 = vector.load %arg7[%c0_3, %c0_4] : memref<2x1xf32, #tpu.memory_space<vmem>>, vector<2x1xf32>
    %c0_5 = arith.constant 0 : index
    %c0_6 = arith.constant 0 : index
    %3 = vector.load %arg9[%c0_5, %c0_6] : memref<4x1xf32, #tpu.memory_space<vmem>>, vector<4x1xf32>
    %cst = arith.constant 0.000000e+00 : f32
    %4 = vector.broadcast %cst : f32 to vector<4x128xf32>
    %c0_7 = arith.constant 0 : index
    %c0_8 = arith.constant 0 : index
    %c0_9 = arith.constant 0 : index
    %c0_10 = arith.constant 0 : index
    %5 = vector.load %arg1[%c0_7, %c0_8, %c0_9, %c0_10] : memref<1x4x4x128xf32, #tpu.memory_space<vmem>>, vector<1x4x1x128xf32>
    %6 = vector.shape_cast %5 : vector<1x4x1x128xf32> to vector<4x128xf32>
    %7 = arith.addf %4, %6 : vector<4x128xf32>
    %c0_11 = arith.constant 0 : index
    %c0_12 = arith.constant 0 : index
    %c1 = arith.constant 1 : index
    %c0_13 = arith.constant 0 : index
    %8 = vector.load %arg1[%c0_11, %c0_12, %c1, %c0_13] : memref<1x4x4x128xf32, #tpu.memory_space<vmem>>, vector<1x4x1x128xf32>
    %9 = vector.shape_cast %8 : vector<1x4x1x128xf32> to vector<4x128xf32>
    %10 = arith.addf %7, %9 : vector<4x128xf32>
    %c0_14 = arith.constant 0 : index
    %c0_15 = arith.constant 0 : index
    %c2 = arith.constant 2 : index
    %c0_16 = arith.constant 0 : index
    %11 = vector.load %arg1[%c0_14, %c0_15, %c2, %c0_16] : memref<1x4x4x128xf32, #tpu.memory_space<vmem>>, vector<1x4x1x128xf32>
    %12 = vector.shape_cast %11 : vector<1x4x1x128xf32> to vector<4x128xf32>
    %13 = arith.addf %10, %12 : vector<4x128xf32>
    %c0_17 = arith.constant 0 : index
    %c0_18 = arith.constant 0 : index
    %c3 = arith.constant 3 : index
    %c0_19 = arith.constant 0 : index
    %14 = vector.load %arg1[%c0_17, %c0_18, %c3, %c0_19] : memref<1x4x4x128xf32, #tpu.memory_space<vmem>>, vector<1x4x1x128xf32>
    %15 = vector.shape_cast %14 : vector<1x4x1x128xf32> to vector<4x128xf32>
    %16 = arith.addf %13, %15 : vector<4x128xf32>
    %c0_20 = arith.constant 0 : index
    %c0_21 = arith.constant 0 : index
    %17 = vector.load %arg2[%c0_20, %c0_21] : memref<128x8xf32, #tpu.memory_space<vmem>>, vector<128x8xf32>
    %cst_22 = arith.constant dense<0.000000e+00> : vector<4x8xf32>
    %18 = tpu.matmul %16, %17, %cst_22 {dimension_numbers = #tpu.dot_dimension_numbers<[1], [0], [0], [1], [0, 0, 1, 1], [], []>} : vector<4x128xf32>, vector<128x8xf32>, vector<4x8xf32> -> vector<4x8xf32>
    %cst_23 = arith.constant 1.562500e-02 : f32
    %19 = vector.broadcast %cst_23 : f32 to vector<4x8xf32>
    %20 = arith.mulf %18, %19 : vector<4x8xf32>
    %c0_24 = arith.constant 0 : index
    %c0_25 = arith.constant 0 : index
    %21 = vector.load %arg3[%c0_24, %c0_25] : memref<128x16xf32, #tpu.memory_space<vmem>>, vector<128x16xf32>
    %cst_26 = arith.constant dense<0.000000e+00> : vector<4x16xf32>
    %22 = tpu.matmul %16, %21, %cst_26 {dimension_numbers = #tpu.dot_dimension_numbers<[1], [0], [0], [1], [0, 0, 1, 1], [], []>} : vector<4x128xf32>, vector<128x16xf32>, vector<4x16xf32> -> vector<4x16xf32>
    %cst_27 = arith.constant 3.125000e-02 : f32
    %23 = vector.broadcast %cst_27 : f32 to vector<4x16xf32>
    %24 = arith.mulf %22, %23 : vector<4x16xf32>
    %cst_28 = arith.constant dense<0.000000e+00> : vector<2x8xf32>
    %25 = tpu.matmul %0, %20, %cst_28 {dimension_numbers = #tpu.dot_dimension_numbers<[1], [0], [0], [1], [0, 0, 1, 1], [], []>} : vector<2x4xf32>, vector<4x8xf32>, vector<2x8xf32> -> vector<2x8xf32>
    %cst_29 = arith.constant dense<0.000000e+00> : vector<2x16xf32>
    %26 = tpu.matmul %0, %24, %cst_29 {dimension_numbers = #tpu.dot_dimension_numbers<[1], [0], [0], [1], [0, 0, 1, 1], [], []>} : vector<2x4xf32>, vector<4x16xf32>, vector<2x16xf32> -> vector<2x16xf32>
    %c0_30 = arith.constant 0 : index
    %c0_31 = arith.constant 0 : index
    %27 = vector.load %arg4[%c0_30, %c0_31] : memref<8x128xf32, #tpu.memory_space<vmem>>, vector<8x128xf32>
    %cst_32 = arith.constant dense<0.000000e+00> : vector<2x128xf32>
    %28 = tpu.matmul %25, %27, %cst_32 {dimension_numbers = #tpu.dot_dimension_numbers<[1], [0], [0], [1], [0, 0, 1, 1], [], []>} : vector<2x8xf32>, vector<8x128xf32>, vector<2x128xf32> -> vector<2x128xf32>
    %c0_33 = arith.constant 0 : index
    %c0_34 = arith.constant 0 : index
    %29 = vector.load %arg5[%c0_33, %c0_34] : memref<16x128xf32, #tpu.memory_space<vmem>>, vector<16x128xf32>
    %cst_35 = arith.constant dense<0.000000e+00> : vector<2x128xf32>
    %30 = tpu.matmul %26, %29, %cst_35 {dimension_numbers = #tpu.dot_dimension_numbers<[1], [0], [0], [1], [0, 0, 1, 1], [], []>} : vector<2x16xf32>, vector<16x128xf32>, vector<2x128xf32> -> vector<2x128xf32>
    %31 = arith.addf %28, %30 : vector<2x128xf32>
    %32 = vector.broadcast %2 : vector<2x1xf32> to vector<2x128xf32>
    %33 = arith.addf %31, %32 : vector<2x128xf32>
    %c0_36 = arith.constant 0 : index
    %c0_37 = arith.constant 0 : index
    %c0_38 = arith.constant 0 : index
    %c0_39 = arith.constant 0 : index
    %34 = vector.load %arg1[%c0_36, %c0_37, %c0_38, %c0_39] : memref<1x4x4x128xf32, #tpu.memory_space<vmem>>, vector<1x4x1x128xf32>
    %35 = vector.shape_cast %34 : vector<1x4x1x128xf32> to vector<4x128xf32>
    %cst_40 = arith.constant dense<0.000000e+00> : vector<4xf32>
    %36 = vector.multi_reduction <add>, %35, %cst_40 [1] : vector<4x128xf32> to vector<4xf32>
    %37 = vector.shape_cast %36 : vector<4xf32> to vector<4x1xf32>
    %cst_41 = arith.constant 7.812500e-03 : f32
    %38 = vector.broadcast %cst_41 : f32 to vector<4x1xf32>
    %39 = arith.mulf %37, %38 : vector<4x1xf32>
    %cst_42 = arith.constant dense<0.000000e+00> : vector<2x1xf32>
    %40 = tpu.matmul %0, %39, %cst_42 {dimension_numbers = #tpu.dot_dimension_numbers<[1], [0], [0], [1], [0, 0, 1, 1], [], []>} : vector<2x4xf32>, vector<4x1xf32>, vector<2x1xf32> -> vector<2x1xf32>
    %41 = vector.broadcast %40 : vector<2x1xf32> to vector<2x128xf32>
    %42 = arith.addf %41, %33 : vector<2x128xf32>
    %cst_43 = arith.constant 0.000000e+00 : f32
    %43 = vector.broadcast %cst_43 : f32 to vector<2x128xf32>
    %44 = arith.maximumf %42, %43 : vector<2x128xf32>
    %cst_44 = arith.constant dense<0.000000e+00> : vector<4x128xf32>
    %45 = tpu.matmul %1, %44, %cst_44 {dimension_numbers = #tpu.dot_dimension_numbers<[1], [0], [0], [1], [0, 0, 1, 1], [], []>} : vector<4x2xf32>, vector<2x128xf32>, vector<4x128xf32> -> vector<4x128xf32>
    %46 = vector.broadcast %3 : vector<4x1xf32> to vector<4x128xf32>
    %47 = arith.addf %45, %46 : vector<4x128xf32>
    %48 = arith.negf %47 : vector<4x128xf32>
    %49 = math.exp %48 : vector<4x128xf32>
    %cst_45 = arith.constant 1.000000e+00 : f32
    %50 = vector.broadcast %cst_45 : f32 to vector<4x128xf32>
    %51 = arith.addf %50, %49 : vector<4x128xf32>
    %52 = arith.divf %50, %51 : vector<4x128xf32>
    %53 = arith.mulf %35, %52 : vector<4x128xf32>
    %c0_46 = arith.constant 0 : index
    %c0_47 = arith.constant 0 : index
    %c0_48 = arith.constant 0 : index
    %c0_49 = arith.constant 0 : index
    %54 = vector.load %arg10[%c0_46, %c0_47, %c0_48, %c0_49] : memref<1x4x4x128xf32, #tpu.memory_space<vmem>>, vector<1x4x1x128xf32>
    %55 = vector.shape_cast %54 : vector<1x4x1x128xf32> to vector<4x128xf32>
    %56 = vector.shape_cast %53 : vector<4x128xf32> to vector<1x4x1x128xf32>
    tpu.vector_store %arg10[%c0_46, %c0_47, %c0_48, %c0_49], %56 {strides = array<i32>} : memref<1x4x4x128xf32, #tpu.memory_space<vmem>>, vector<1x4x1x128xf32>,
    %c0_50 = arith.constant 0 : index
    %c0_51 = arith.constant 0 : index
    %c1_52 = arith.constant 1 : index
    %c0_53 = arith.constant 0 : index
    %57 = vector.load %arg1[%c0_50, %c0_51, %c1_52, %c0_53] : memref<1x4x4x128xf32, #tpu.memory_space<vmem>>, vector<1x4x1x128xf32>
    %58 = vector.shape_cast %57 : vector<1x4x1x128xf32> to vector<4x128xf32>
    %cst_54 = arith.constant dense<0.000000e+00> : vector<4xf32>
    %59 = vector.multi_reduction <add>, %58, %cst_54 [1] : vector<4x128xf32> to vector<4xf32>
    %60 = vector.shape_cast %59 : vector<4xf32> to vector<4x1xf32>
    %cst_55 = arith.constant 7.812500e-03 : f32
    %61 = vector.broadcast %cst_55 : f32 to vector<4x1xf32>
    %62 = arith.mulf %60, %61 : vector<4x1xf32>
    %cst_56 = arith.constant dense<0.000000e+00> : vector<2x1xf32>
    %63 = tpu.matmul %0, %62, %cst_56 {dimension_numbers = #tpu.dot_dimension_numbers<[1], [0], [0], [1], [0, 0, 1, 1], [], []>} : vector<2x4xf32>, vector<4x1xf32>, vector<2x1xf32> -> vector<2x1xf32>
    %64 = vector.broadcast %63 : vector<2x1xf32> to vector<2x128xf32>
    %65 = arith.addf %64, %33 : vector<2x128xf32>
    %cst_57 = arith.constant 0.000000e+00 : f32
    %66 = vector.broadcast %cst_57 : f32 to vector<2x128xf32>
    %67 = arith.maximumf %65, %66 : vector<2x128xf32>
    %cst_58 = arith.constant dense<0.000000e+00> : vector<4x128xf32>
    %68 = tpu.matmul %1, %67, %cst_58 {dimension_numbers = #tpu.dot_dimension_numbers<[1], [0], [0], [1], [0, 0, 1, 1], [], []>} : vector<4x2xf32>, vector<2x128xf32>, vector<4x128xf32> -> vector<4x128xf32>
    %69 = vector.broadcast %3 : vector<4x1xf32> to vector<4x128xf32>
    %70 = arith.addf %68, %69 : vector<4x128xf32>
    %71 = arith.negf %70 : vector<4x128xf32>
    %72 = math.exp %71 : vector<4x128xf32>
    %cst_59 = arith.constant 1.000000e+00 : f32
    %73 = vector.broadcast %cst_59 : f32 to vector<4x128xf32>
    %74 = arith.addf %73, %72 : vector<4x128xf32>
    %75 = arith.divf %73, %74 : vector<4x128xf32>
    %76 = arith.mulf %58, %75 : vector<4x128xf32>
    %c0_60 = arith.constant 0 : index
    %c0_61 = arith.constant 0 : index
    %c1_62 = arith.constant 1 : index
    %c0_63 = arith.constant 0 : index
    %77 = vector.load %arg10[%c0_60, %c0_61, %c1_62, %c0_63] : memref<1x4x4x128xf32, #tpu.memory_space<vmem>>, vector<1x4x1x128xf32>
    %78 = vector.shape_cast %77 : vector<1x4x1x128xf32> to vector<4x128xf32>
    %79 = vector.shape_cast %76 : vector<4x128xf32> to vector<1x4x1x128xf32>
    tpu.vector_store %arg10[%c0_60, %c0_61, %c1_62, %c0_63], %79 {strides = array<i32>} : memref<1x4x4x128xf32, #tpu.memory_space<vmem>>, vector<1x4x1x128xf32>,
    %c0_64 = arith.constant 0 : index
    %c0_65 = arith.constant 0 : index
    %c2_66 = arith.constant 2 : index
    %c0_67 = arith.constant 0 : index
    %80 = vector.load %arg1[%c0_64, %c0_65, %c2_66, %c0_67] : memref<1x4x4x128xf32, #tpu.memory_space<vmem>>, vector<1x4x1x128xf32>
    %81 = vector.shape_cast %80 : vector<1x4x1x128xf32> to vector<4x128xf32>
    %cst_68 = arith.constant dense<0.000000e+00> : vector<4xf32>
    %82 = vector.multi_reduction <add>, %81, %cst_68 [1] : vector<4x128xf32> to vector<4xf32>
    %83 = vector.shape_cast %82 : vector<4xf32> to vector<4x1xf32>
    %cst_69 = arith.constant 7.812500e-03 : f32
    %84 = vector.broadcast %cst_69 : f32 to vector<4x1xf32>
    %85 = arith.mulf %83, %84 : vector<4x1xf32>
    %cst_70 = arith.constant dense<0.000000e+00> : vector<2x1xf32>
    %86 = tpu.matmul %0, %85, %cst_70 {dimension_numbers = #tpu.dot_dimension_numbers<[1], [0], [0], [1], [0, 0, 1, 1], [], []>} : vector<2x4xf32>, vector<4x1xf32>, vector<2x1xf32> -> vector<2x1xf32>
    %87 = vector.broadcast %86 : vector<2x1xf32> to vector<2x128xf32>
    %88 = arith.addf %87, %33 : vector<2x128xf32>
    %cst_71 = arith.constant 0.000000e+00 : f32
    %89 = vector.broadcast %cst_71 : f32 to vector<2x128xf32>
    %90 = arith.maximumf %88, %89 : vector<2x128xf32>
    %cst_72 = arith.constant dense<0.000000e+00> : vector<4x128xf32>
    %91 = tpu.matmul %1, %90, %cst_72 {dimension_numbers = #tpu.dot_dimension_numbers<[1], [0], [0], [1], [0, 0, 1, 1], [], []>} : vector<4x2xf32>, vector<2x128xf32>, vector<4x128xf32> -> vector<4x128xf32>
    %92 = vector.broadcast %3 : vector<4x1xf32> to vector<4x128xf32>
    %93 = arith.addf %91, %92 : vector<4x128xf32>
    %94 = arith.negf %93 : vector<4x128xf32>
    %95 = math.exp %94 : vector<4x128xf32>
    %cst_73 = arith.constant 1.000000e+00 : f32
    %96 = vector.broadcast %cst_73 : f32 to vector<4x128xf32>
    %97 = arith.addf %96, %95 : vector<4x128xf32>
    %98 = arith.divf %96, %97 : vector<4x128xf32>
    %99 = arith.mulf %81, %98 : vector<4x128xf32>
    %c0_74 = arith.constant 0 : index
    %c0_75 = arith.constant 0 : index
    %c2_76 = arith.constant 2 : index
    %c0_77 = arith.constant 0 : index
    %100 = vector.load %arg10[%c0_74, %c0_75, %c2_76, %c0_77] : memref<1x4x4x128xf32, #tpu.memory_space<vmem>>, vector<1x4x1x128xf32>
    %101 = vector.shape_cast %100 : vector<1x4x1x128xf32> to vector<4x128xf32>
    %102 = vector.shape_cast %99 : vector<4x128xf32> to vector<1x4x1x128xf32>
    tpu.vector_store %arg10[%c0_74, %c0_75, %c2_76, %c0_77], %102 {strides = array<i32>} : memref<1x4x4x128xf32, #tpu.memory_space<vmem>>, vector<1x4x1x128xf32>,
    %c0_78 = arith.constant 0 : index
    %c0_79 = arith.constant 0 : index
    %c3_80 = arith.constant 3 : index
    %c0_81 = arith.constant 0 : index
    %103 = vector.load %arg1[%c0_78, %c0_79, %c3_80, %c0_81] : memref<1x4x4x128xf32, #tpu.memory_space<vmem>>, vector<1x4x1x128xf32>
    %104 = vector.shape_cast %103 : vector<1x4x1x128xf32> to vector<4x128xf32>
    %cst_82 = arith.constant dense<0.000000e+00> : vector<4xf32>
    %105 = vector.multi_reduction <add>, %104, %cst_82 [1] : vector<4x128xf32> to vector<4xf32>
    %106 = vector.shape_cast %105 : vector<4xf32> to vector<4x1xf32>
    %cst_83 = arith.constant 7.812500e-03 : f32
    %107 = vector.broadcast %cst_83 : f32 to vector<4x1xf32>
    %108 = arith.mulf %106, %107 : vector<4x1xf32>
    %cst_84 = arith.constant dense<0.000000e+00> : vector<2x1xf32>
    %109 = tpu.matmul %0, %108, %cst_84 {dimension_numbers = #tpu.dot_dimension_numbers<[1], [0], [0], [1], [0, 0, 1, 1], [], []>} : vector<2x4xf32>, vector<4x1xf32>, vector<2x1xf32> -> vector<2x1xf32>
    %110 = vector.broadcast %109 : vector<2x1xf32> to vector<2x128xf32>
    %111 = arith.addf %110, %33 : vector<2x128xf32>
    %cst_85 = arith.constant 0.000000e+00 : f32
    %112 = vector.broadcast %cst_85 : f32 to vector<2x128xf32>
    %113 = arith.maximumf %111, %112 : vector<2x128xf32>
    %cst_86 = arith.constant dense<0.000000e+00> : vector<4x128xf32>
    %114 = tpu.matmul %1, %113, %cst_86 {dimension_numbers = #tpu.dot_dimension_numbers<[1], [0], [0], [1], [0, 0, 1, 1], [], []>} : vector<4x2xf32>, vector<2x128xf32>, vector<4x128xf32> -> vector<4x128xf32>
    %115 = vector.broadcast %3 : vector<4x1xf32> to vector<4x128xf32>
    %116 = arith.addf %114, %115 : vector<4x128xf32>
    %117 = arith.negf %116 : vector<4x128xf32>
    %118 = math.exp %117 : vector<4x128xf32>
    %cst_87 = arith.constant 1.000000e+00 : f32
    %119 = vector.broadcast %cst_87 : f32 to vector<4x128xf32>
    %120 = arith.addf %119, %118 : vector<4x128xf32>
    %121 = arith.divf %119, %120 : vector<4x128xf32>
    %122 = arith.mulf %104, %121 : vector<4x128xf32>
    %c0_88 = arith.constant 0 : index
    %c0_89 = arith.constant 0 : index
    %c3_90 = arith.constant 3 : index
    %c0_91 = arith.constant 0 : index
    %123 = vector.load %arg10[%c0_88, %c0_89, %c3_90, %c0_91] : memref<1x4x4x128xf32, #tpu.memory_space<vmem>>, vector<1x4x1x128xf32>
    %124 = vector.shape_cast %123 : vector<1x4x1x128xf32> to vector<4x128xf32>
    %125 = vector.shape_cast %122 : vector<4x128xf32> to vector<1x4x1x128xf32>
    tpu.vector_store %arg10[%c0_88, %c0_89, %c3_90, %c0_91], %125 {strides = array<i32>} : memref<1x4x4x128xf32, #tpu.memory_space<vmem>>, vector<1x4x1x128xf32>,
    return
  }
  func.func @transform_0(%arg0: i32) -> (i32, i32, i32, i32) {
    %c0_i32 = arith.constant 0 : i32
    %c0_i32_0 = arith.constant 0 : i32
    %c0_i32_1 = arith.constant 0 : i32
    %c0_i32_2 = arith.constant 0 : i32
    return %arg0, %c0_i32, %c0_i32_0, %c0_i32_1 : i32, i32, i32, i32
  }
  func.func @transform_1(%arg0: i32) -> (i32, i32) {
    %c0_i32 = arith.constant 0 : i32
    %c0_i32_0 = arith.constant 0 : i32
    %c0_i32_1 = arith.constant 0 : i32
    return %c0_i32, %c0_i32_0 : i32, i32
  }
  func.func @transform_2(%arg0: i32) -> (i32, i32) {
    %c0_i32 = arith.constant 0 : i32
    %c0_i32_0 = arith.constant 0 : i32
    %c0_i32_1 = arith.constant 0 : i32
    return %c0_i32, %c0_i32_0 : i32, i32
  }
  func.func @transform_3(%arg0: i32) -> (i32, i32) {
    %c0_i32 = arith.constant 0 : i32
    %c0_i32_0 = arith.constant 0 : i32
    %c0_i32_1 = arith.constant 0 : i32
    return %c0_i32, %c0_i32_0 : i32, i32
  }
  func.func @transform_4(%arg0: i32) -> (i32, i32) {
    %c0_i32 = arith.constant 0 : i32
    %c0_i32_0 = arith.constant 0 : i32
    %c0_i32_1 = arith.constant 0 : i32
    return %c0_i32, %c0_i32_0 : i32, i32
  }
  func.func @transform_5(%arg0: i32) -> (i32, i32) {
    %c0_i32 = arith.constant 0 : i32
    %c0_i32_0 = arith.constant 0 : i32
    %c0_i32_1 = arith.constant 0 : i32
    return %c0_i32, %c0_i32_0 : i32, i32
  }
  func.func @transform_6(%arg0: i32) -> (i32, i32) {
    %c0_i32 = arith.constant 0 : i32
    %c0_i32_0 = arith.constant 0 : i32
    %c0_i32_1 = arith.constant 0 : i32
    return %c0_i32, %c0_i32_0 : i32, i32
  }
  func.func @transform_7(%arg0: i32) -> (i32, i32) {
    %c0_i32 = arith.constant 0 : i32
    %c0_i32_0 = arith.constant 0 : i32
    %c0_i32_1 = arith.constant 0 : i32
    return %c0_i32, %c0_i32_0 : i32, i32
  }
  func.func @transform_8(%arg0: i32) -> (i32, i32) {
    %c0_i32 = arith.constant 0 : i32
    %c0_i32_0 = arith.constant 0 : i32
    %c0_i32_1 = arith.constant 0 : i32
    return %c0_i32, %c0_i32_0 : i32, i32
  }
  func.func @transform_9(%arg0: i32) -> (i32, i32, i32, i32) {
    %c0_i32 = arith.constant 0 : i32
    %c0_i32_0 = arith.constant 0 : i32
    %c0_i32_1 = arith.constant 0 : i32
    %c0_i32_2 = arith.constant 0 : i32
    return %arg0, %c0_i32, %c0_i32_0, %c0_i32_1 : i32, i32, i32, i32
  }
}

</mosaic_0001>

<llo_original>
// kernel: tpu_custom_call.1
$region0: #{tpu_custom_call.1}
  #allocation0 [shape = 'u32[]', space=smem, size = 0x4, offset = 0x4, fixed_abs, tag = 'smem constant byte address 0x4 - core index']
  #allocation1 [shape = 'u32[144,128]{1,0:T(1,128)}', space=vmem, size = 0x12000, scoped, tag = 'internal scratch']
  %s0 = inlined_call_operand.vmem [shape: f32[2,4,4,128], index: 0, kind: input, shape index: {}]
  %s1 = inlined_call_operand.vmem [shape: f32[128,8], index: 1, kind: input, shape index: {}]
  %s2 = inlined_call_operand.vmem [shape: f32[128,16], index: 2, kind: input, shape index: {}]
  %s3 = inlined_call_operand.vmem [shape: f32[8,128], index: 3, kind: input, shape index: {}]
  %s4 = inlined_call_operand.vmem [shape: f32[16,128], index: 4, kind: input, shape index: {}]
  %s5 = inlined_call_operand.vmem [shape: f32[2,4], index: 5, kind: input, shape index: {}]
  %s6 = inlined_call_operand.vmem [shape: f32[2,1], index: 6, kind: input, shape index: {}]
  %s7 = inlined_call_operand.vmem [shape: f32[4,2], index: 7, kind: input, shape index: {}]
  %s8 = inlined_call_operand.vmem [shape: f32[4,1], index: 8, kind: input, shape index: {}]
  %s9 = inlined_call_operand.hbm [shape: f32[2,4,4,128], index: 9, kind: output, shape index: {}]
  %s10 = sld [smem:[#allocation0]]
  $region69: #{tpu_custom_call.1} parent=0
    _
  %s12 = ssub.s32 1, %s10
  %s13 = scalar_select 0, %s12, %s10
  $region1: #{tpu_custom_call.1} parent=0
    #allocation2 [shape = 'u8[16384]{0}', space=vmem, size = 0x4000, scoped, tag = 'output window, operand 0']
    #allocation3 [shape = 's32[2]{0}', space=sflag, size = 0x8, scoped, tag = 'scoped memory for tpu_custom_call.1']
    %14 = vsyncpa [#allocation3], 0
    %s15 = scalar_lea.sflag [#allocation3], 1
    %16 = vsyncpa %s15, 0
    loop: start=0, step=1, limit=4
    $region2: #{tpu_custom_call.1} parent=1 // loop_pre_header
      _
    $region3: #{tpu_custom_call.1} parent=1 // loop_header
      %s18 = sphi 0, %s22
      %p19 = scmp.ge.s32.totalorder %s18, 4
      %s28 = sphi 0, %s30
      %s31 = sphi 0, %s28
      %s32 = sphi 0, %s31
      %s48 = sphi 0, %s32
      %s52 = sphi 0, %s52
      %s54 = sphi 0, %s52
      %s55 = sphi 0, %s54
      %s69 = sphi 0, %s55
      %s73 = sphi 0, %s73
      %s75 = sphi 0, %s73
      %s76 = sphi 0, %s75
      %s90 = sphi 0, %s76
      %s94 = sphi 0, %s94
      %s96 = sphi 0, %s94
      %s97 = sphi 0, %s96
      %s111 = sphi 0, %s97
      %s115 = sphi 0, %s115
      %s117 = sphi 0, %s115
      %s118 = sphi 0, %s117
      %s132 = sphi 0, %s118
      %s136 = sphi 0, %s136
      %s138 = sphi 0, %s136
      %s139 = sphi 0, %s138
      %s153 = sphi 0, %s139
      %s157 = sphi 0, %s157
      %s159 = sphi 0, %s157
      %s160 = sphi 0, %s159
      %s174 = sphi 0, %s160
      %s178 = sphi 0, %s178
      %s180 = sphi 0, %s178
      %s181 = sphi 0, %s180
      %s195 = sphi 0, %s181
      %s199 = sphi 0, %s199
      %s201 = sphi 0, %s199
      %s202 = sphi 0, %s201
      %s216 = sphi 0, %s202
      %s222 = sphi 0, %s224
      %s225 = sphi 0, %s222
      %s226 = sphi 0, %s225
      %s242 = sphi 0, %s226
    $region4: #{tpu_custom_call.1} parent=1 // loop_header_branch
      %21 = sbr.rel (%p19) target = $region8
    $region5: #{tpu_custom_call.1} parent=1 // loop_body
      %s23 = ssub.s32 %s18, 1
      %s24 = ssub.s32 %s18, 2
      %s25 = sadd.s32 %s18, 1
      %s26 = ssub.s32 %s18, %s25
      %p27 = scmp.eq.s32.totalorder %s26, 0
      %s29 = sadd.s32 %s28, 1
      %s30 = scalar_select %p27, %s28, %s29
      %p33 = pneg %p27
      %p34 = scmp.eq.s32.totalorder %s18, 1
      %p35 = por %p33, %p34
      %p36 = scmp.ne.s32.totalorder %s28, %s31
      %p37 = scmp.eq.s32.totalorder %s18, 0
      %p38 = por %p36, %p37
      %p39 = scmp.ne.s32.totalorder %s28, %s31
      %p40 = scmp.eq.s32.totalorder %s23, 1
      %p41 = por %p39, %p40
      %p42 = scmp.ne.s32.totalorder %s31, %s32
      %p43 = scmp.eq.s32.totalorder %s23, 0
      %p44 = por %p42, %p43
      %p45 = scmp.ne.s32.totalorder %s31, %s32
      %p46 = scmp.eq.s32.totalorder %s24, 1
      %p47 = por %p45, %p46
      %p49 = scmp.ne.s32.totalorder %s32, %s48
      %p50 = scmp.eq.s32.totalorder %s24, 0
      %p51 = por %p49, %p50
      %s53 = sadd.s32 %s52, 1
      %p56 = scmp.eq.s32.totalorder %s18, 1
      %p57 = scmp.ne.s32.totalorder %s52, %s54
      %p58 = scmp.eq.s32.totalorder %s18, 0
      %p59 = por %p57, %p58
      %p60 = scmp.ne.s32.totalorder %s52, %s54
      %p61 = scmp.eq.s32.totalorder %s23, 1
      %p62 = por %p60, %p61
      %p63 = scmp.ne.s32.totalorder %s54, %s55
      %p64 = scmp.eq.s32.totalorder %s23, 0
      %p65 = por %p63, %p64
      %p66 = scmp.ne.s32.totalorder %s54, %s55
      %p67 = scmp.eq.s32.totalorder %s24, 1
      %p68 = por %p66, %p67
      %p70 = scmp.ne.s32.totalorder %s55, %s69
      %p71 = scmp.eq.s32.totalorder %s24, 0
      %p72 = por %p70, %p71
      %s74 = sadd.s32 %s73, 1
      %p77 = scmp.eq.s32.totalorder %s18, 1
      %p78 = scmp.ne.s32.totalorder %s73, %s75
      %p79 = scmp.eq.s32.totalorder %s18, 0
      %p80 = por %p78, %p79
      %p81 = scmp.ne.s32.totalorder %s73, %s75
      %p82 = scmp.eq.s32.totalorder %s23, 1
      %p83 = por %p81, %p82
      %p84 = scmp.ne.s32.totalorder %s75, %s76
      %p85 = scmp.eq.s32.totalorder %s23, 0
      %p86 = por %p84, %p85
      %p87 = scmp.ne.s32.totalorder %s75, %s76
      %p88 = scmp.eq.s32.totalorder %s24, 1
      %p89 = por %p87, %p88
      %p91 = scmp.ne.s32.totalorder %s76, %s90
      %p92 = scmp.eq.s32.totalorder %s24, 0
      %p93 = por %p91, %p92
      %s95 = sadd.s32 %s94, 1
      %p98 = scmp.eq.s32.totalorder %s18, 1
      %p99 = scmp.ne.s32.totalorder %s94, %s96
      %p100 = scmp.eq.s32.totalorder %s18, 0
      %p101 = por %p99, %p100
      %p102 = scmp.ne.s32.totalorder %s94, %s96
      %p103 = scmp.eq.s32.totalorder %s23, 1
      %p104 = por %p102, %p103
      %p105 = scmp.ne.s32.totalorder %s96, %s97
      %p106 = scmp.eq.s32.totalorder %s23, 0
      %p107 = por %p105, %p106
      %p108 = scmp.ne.s32.totalorder %s96, %s97
      %p109 = scmp.eq.s32.totalorder %s24, 1
      %p110 = por %p108, %p109
      %p112 = scmp.ne.s32.totalorder %s97, %s111
      %p113 = scmp.eq.s32.totalorder %s24, 0
      %p114 = por %p112, %p113
      %s116 = sadd.s32 %s115, 1
      %p119 = scmp.eq.s32.totalorder %s18, 1
      %p120 = scmp.ne.s32.totalorder %s115, %s117
      %p121 = scmp.eq.s32.totalorder %s18, 0
      %p122 = por %p120, %p121
      %p123 = scmp.ne.s32.totalorder %s115, %s117
      %p124 = scmp.eq.s32.totalorder %s23, 1
      %p125 = por %p123, %p124
      %p126 = scmp.ne.s32.totalorder %s117, %s118
      %p127 = scmp.eq.s32.totalorder %s23, 0
      %p128 = por %p126, %p127
      %p129 = scmp.ne.s32.totalorder %s117, %s118
      %p130 = scmp.eq.s32.totalorder %s24, 1
      %p131 = por %p129, %p130
      %p133 = scmp.ne.s32.totalorder %s118, %s132
      %p134 = scmp.eq.s32.totalorder %s24, 0
      %p135 = por %p133, %p134
      %s137 = sadd.s32 %s136, 1
      %p140 = scmp.eq.s32.totalorder %s18, 1
      %p141 = scmp.ne.s32.totalorder %s136, %s138
      %p142 = scmp.eq.s32.totalorder %s18, 0
      %p143 = por %p141, %p142
      %p144 = scmp.ne.s32.totalorder %s136, %s138
      %p145 = scmp.eq.s32.totalorder %s23, 1
      %p146 = por %p144, %p145
      %p147 = scmp.ne.s32.totalorder %s138, %s139
      %p148 = scmp.eq.s32.totalorder %s23, 0
      %p149 = por %p147, %p148
      %p150 = scmp.ne.s32.totalorder %s138, %s139
      %p151 = scmp.eq.s32.totalorder %s24, 1
      %p152 = por %p150, %p151
      %p154 = scmp.ne.s32.totalorder %s139, %s153
      %p155 = scmp.eq.s32.totalorder %s24, 0
      %p156 = por %p154, %p155
      %s158 = sadd.s32 %s157, 1
      %p161 = scmp.eq.s32.totalorder %s18, 1
      %p162 = scmp.ne.s32.totalorder %s157, %s159
      %p163 = scmp.eq.s32.totalorder %s18, 0
      %p164 = por %p162, %p163
      %p165 = scmp.ne.s32.totalorder %s157, %s159
      %p166 = scmp.eq.s32.totalorder %s23, 1
      %p167 = por %p165, %p166
      %p168 = scmp.ne.s32.totalorder %s159, %s160
      %p169 = scmp.eq.s32.totalorder %s23, 0
      %p170 = por %p168, %p169
      %p171 = scmp.ne.s32.totalorder %s159, %s160
      %p172 = scmp.eq.s32.totalorder %s24, 1
      %p173 = por %p171, %p172
      %p175 = scmp.ne.s32.totalorder %s160, %s174
      %p176 = scmp.eq.s32.totalorder %s24, 0
      %p177 = por %p175, %p176
      %s179 = sadd.s32 %s178, 1
      %p182 = scmp.eq.s32.totalorder %s18, 1
      %p183 = scmp.ne.s32.totalorder %s178, %s180
      %p184 = scmp.eq.s32.totalorder %s18, 0
      %p185 = por %p183, %p184
      %p186 = scmp.ne.s32.totalorder %s178, %s180
      %p187 = scmp.eq.s32.totalorder %s23, 1
      %p188 = por %p186, %p187
      %p189 = scmp.ne.s32.totalorder %s180, %s181
      %p190 = scmp.eq.s32.totalorder %s23, 0
      %p191 = por %p189, %p190
      %p192 = scmp.ne.s32.totalorder %s180, %s181
      %p193 = scmp.eq.s32.totalorder %s24, 1
      %p194 = por %p192, %p193
      %p196 = scmp.ne.s32.totalorder %s181, %s195
      %p197 = scmp.eq.s32.totalorder %s24, 0
      %p198 = por %p196, %p197
      %s200 = sadd.s32 %s199, 1
      %p203 = scmp.eq.s32.totalorder %s18, 1
      %p204 = scmp.ne.s32.totalorder %s199, %s201
      %p205 = scmp.eq.s32.totalorder %s18, 0
      %p206 = por %p204, %p205
      %p207 = scmp.ne.s32.totalorder %s199, %s201
      %p208 = scmp.eq.s32.totalorder %s23, 1
      %p209 = por %p207, %p208
      %p210 = scmp.ne.s32.totalorder %s201, %s202
      %p211 = scmp.eq.s32.totalorder %s23, 0
      %p212 = por %p210, %p211
      %p213 = scmp.ne.s32.totalorder %s201, %s202
      %p214 = scmp.eq.s32.totalorder %s24, 1
      %p215 = por %p213, %p214
      %p217 = scmp.ne.s32.totalorder %s202, %s216
      %p218 = scmp.eq.s32.totalorder %s24, 0
      %p219 = por %p217, %p218
      %s220 = ssub.s32 %s18, %s25
      %p221 = scmp.eq.s32.totalorder %s220, 0
      %s223 = sadd.s32 %s222, 1
      %s224 = scalar_select %p221, %s222, %s223
      %p227 = pneg %p221
      %p228 = scmp.eq.s32.totalorder %s18, 1
      %p229 = por %p227, %p228
      %p230 = scmp.ne.s32.totalorder %s222, %s225
      %p231 = scmp.eq.s32.totalorder %s18, 0
      %p232 = por %p230, %p231
      %p233 = scmp.ne.s32.totalorder %s222, %s225
      %p234 = scmp.eq.s32.totalorder %s23, 1
      %p235 = por %p233, %p234
      %p236 = scmp.ne.s32.totalorder %s225, %s226
      %p237 = scmp.eq.s32.totalorder %s23, 0
      %p238 = por %p236, %p237
      %p239 = scmp.ne.s32.totalorder %s225, %s226
      %p240 = scmp.eq.s32.totalorder %s24, 1
      %p241 = por %p239, %p240
      %p243 = scmp.ne.s32.totalorder %s226, %s242
      %p244 = scmp.eq.s32.totalorder %s24, 0
      %p245 = por %p243, %p244
      %p246 = scmp.le.s32.totalorder 1, %s18
      %p247 = scmp.lt.s32.totalorder %s18, 3
      %p248 = pnand %p246, %p247
      %p249 = pneg %p248
      // Predicated region
      $region9: #{tpu_custom_call.1} parent=5 // pred_check
        _
      $region10: #{tpu_custom_call.1} parent=5 // pred_check_branch
        %251 = sbr.rel (%p248) target = $region12
      $region11: #{tpu_custom_call.1} parent=5 // pred_region
        %s252 = ssub.s32 %s18, 1
        // Predicated region
        $region13: #{tpu_custom_call.1} parent=11 // pred_check
          %p253 = pneg %p65
        $region14: #{tpu_custom_call.1} parent=11 // pred_check_branch
          %255 = sbr.rel (%p253) target = $region16
        $region15: #{tpu_custom_call.1} parent=11 // pred_region
          _
        $region16: #{tpu_custom_call.1} parent=11 // pred_fallthru
          _
        // Predicated region
        $region17: #{tpu_custom_call.1} parent=11 // pred_check
          %p256 = pneg %p86
        $region18: #{tpu_custom_call.1} parent=11 // pred_check_branch
          %258 = sbr.rel (%p256) target = $region20
        $region19: #{tpu_custom_call.1} parent=11 // pred_region
          _
        $region20: #{tpu_custom_call.1} parent=11 // pred_fallthru
          _
        // Predicated region
        $region21: #{tpu_custom_call.1} parent=11 // pred_check
          %p259 = pneg %p107
        $region22: #{tpu_custom_call.1} parent=11 // pred_check_branch
          %261 = sbr.rel (%p259) target = $region24
        $region23: #{tpu_custom_call.1} parent=11 // pred_region
          _
        $region24: #{tpu_custom_call.1} parent=11 // pred_fallthru
          _
        // Predicated region
        $region25: #{tpu_custom_call.1} parent=11 // pred_check
          %p262 = pneg %p128
        $region26: #{tpu_custom_call.1} parent=11 // pred_check_branch
          %264 = sbr.rel (%p262) target = $region28
        $region27: #{tpu_custom_call.1} parent=11 // pred_region
          _
        $region28: #{tpu_custom_call.1} parent=11 // pred_fallthru
          _
        // Predicated region
        $region29: #{tpu_custom_call.1} parent=11 // pred_check
          %p265 = pneg %p149
        $region30: #{tpu_custom_call.1} parent=11 // pred_check_branch
          %267 = sbr.rel (%p265) target = $region32
        $region31: #{tpu_custom_call.1} parent=11 // pred_region
          _
        $region32: #{tpu_custom_call.1} parent=11 // pred_fallthru
          _
        // Predicated region
        $region33: #{tpu_custom_call.1} parent=11 // pred_check
          %p268 = pneg %p170
        $region34: #{tpu_custom_call.1} parent=11 // pred_check_branch
          %270 = sbr.rel (%p268) target = $region36
        $region35: #{tpu_custom_call.1} parent=11 // pred_region
          _
        $region36: #{tpu_custom_call.1} parent=11 // pred_fallthru
          _
        // Predicated region
        $region37: #{tpu_custom_call.1} parent=11 // pred_check
          %p271 = pneg %p191
        $region38: #{tpu_custom_call.1} parent=11 // pred_check_branch
          %273 = sbr.rel (%p271) target = $region40
        $region39: #{tpu_custom_call.1} parent=11 // pred_region
          _
        $region40: #{tpu_custom_call.1} parent=11 // pred_fallthru
          _
        // Predicated region
        $region41: #{tpu_custom_call.1} parent=11 // pred_check
          %p274 = pneg %p212
        $region42: #{tpu_custom_call.1} parent=11 // pred_check_branch
          %276 = sbr.rel (%p274) target = $region44
        $region43: #{tpu_custom_call.1} parent=11 // pred_region
          _
        $region44: #{tpu_custom_call.1} parent=11 // pred_fallthru
          _
      $region12: #{tpu_custom_call.1} parent=5 // pred_fallthru
        _
      %p277 = scmp.lt.s32.totalorder %s18, 2
      // Predicated region
      $region45: #{tpu_custom_call.1} parent=5 // pred_check
        %p278 = pneg %p277
      $region46: #{tpu_custom_call.1} parent=5 // pred_check_branch
        %280 = sbr.rel (%p278) target = $region48
      $region47: #{tpu_custom_call.1} parent=5 // pred_region
        // Predicated region
        $region49: #{tpu_custom_call.1} parent=47 // pred_check
          %p281 = pneg %p38
        $region50: #{tpu_custom_call.1} parent=47 // pred_check_branch
          %283 = sbr.rel (%p281) target = $region52
        $region51: #{tpu_custom_call.1} parent=47 // pred_region
          %p284 = scmp.lt.s32.totalorder %s18, 1
          %s285 = scalar_select %p284, %s18, 1
          %s286 = smul.addr %s285, 4
          %s287 = smul.addr %s286, 4
          %s288 = scalar_lea.vmem %s0, %s287
        $region52: #{tpu_custom_call.1} parent=47 // pred_fallthru
          _
      $region48: #{tpu_custom_call.1} parent=5 // pred_fallthru
        _
      %p289 = scmp.le.s32.totalorder 1, %s18
      %p290 = scmp.lt.s32.totalorder %s18, 3
      %p291 = pnand %p289, %p290
      %p292 = pneg %p291
      // Predicated region
      $region53: #{tpu_custom_call.1} parent=5 // pred_check
        _
      $region54: #{tpu_custom_call.1} parent=5 // pred_check_branch
        %294 = sbr.rel (%p291) target = $region56
      $region55: #{tpu_custom_call.1} parent=5 // pred_region
        %s295 = ssub.s32 %s18, 1
        %p296 = scmp.lt.s32.totalorder %s23, 1
        %s297 = scalar_select %p296, %s23, 1
        %s298 = smul.addr %s297, 4
        %s299 = smul.addr %s298, 4
        %s300 = scalar_lea.vmem %s0, %s299
        %p301 = pneg %p44
        %p302 = pneg %p41
        %p303 = pneg %p65
        %p304 = pneg %p62
        %p305 = pneg %p86
        %p306 = pneg %p83
        %p307 = pneg %p107
        %p308 = pneg %p104
        %p309 = pneg %p128
        %p310 = pneg %p125
        %p311 = pneg %p149
        %p312 = pneg %p146
        %p313 = pneg %p170
        %p314 = pneg %p167
        %p315 = pneg %p191
        %p316 = pneg %p188
        %p317 = pneg %p212
        %p318 = pneg %p209
        %p319 = pneg %p238
        %p320 = pneg %p235
        %s321 = sand.u32 %s225, 1
        %s322 = scalar_lea.sflag [#allocation3], %s321
        %s323 = sand.u32 %s225, 1
        %s324 = smul.addr %s323, 16
        %s325 = scalar_lea.vmem [#allocation2], %s324
        %p326 = scmp.lt.s32.totalorder %s23, 1
        %s327 = scalar_select %p326, %s23, 1
        %s328 = smul.addr %s327, 4
        %s329 = smul.addr %s328, 4
        %s330 = scalar_lea.vmem %s0, %s329
        %v331 = vld [vmem:[%s5] sm:$0x3]
        %v332 = vld [vmem:[%s7] sm:$0xf]
        %v333 = vld [vmem:[%s6] sm:$0x3]
        %v334 = vld [vmem:[%s8] sm:$0xf]
        %v335 = vld [vmem:[%s330] sm:$0x1]
        %v336 = vld [vmem:[%s330 + $0x4] sm:$0x1]
        %v337 = vld [vmem:[%s330 + $0x8] sm:$0x1]
        %v338 = vld [vmem:[%s330 + $0xc] sm:$0x1]
        %v339 = vadd.f32 %v335, 0.0
        %v340 = vadd.f32 %v336, 0.0
        %v341 = vadd.f32 %v337, 0.0
        %v342 = vadd.f32 %v338, 0.0
        %v343 = vld [vmem:[%s330 + $0x1] sm:$0x1]
        %v344 = vld [vmem:[%s330 + $0x5] sm:$0x1]
        %v345 = vld [vmem:[%s330 + $0x9] sm:$0x1]
        %v346 = vld [vmem:[%s330 + $0xd] sm:$0x1]
        %v347 = vadd.f32 %v339, %v343
        %v348 = vadd.f32 %v340, %v344
        %v349 = vadd.f32 %v341, %v345
        %v350 = vadd.f32 %v342, %v346
        %v351 = vld [vmem:[%s330 + $0x2] sm:$0x1]
        %v352 = vld [vmem:[%s330 + $0x6] sm:$0x1]
        %v353 = vld [vmem:[%s330 + $0xa] sm:$0x1]
        %v354 = vld [vmem:[%s330 + $0xe] sm:$0x1]
        %v355 = vadd.f32 %v347, %v351
        %v356 = vadd.f32 %v348, %v352
        %v357 = vadd.f32 %v349, %v353
        %v358 = vadd.f32 %v350, %v354
        %v359 = vld [vmem:[%s330 + $0x3] sm:$0x1]
        %v360 = vld [vmem:[%s330 + $0x7] sm:$0x1]
        %v361 = vld [vmem:[%s330 + $0xb] sm:$0x1]
        %v362 = vld [vmem:[%s330 + $0xf] sm:$0x1]
        %v363 = vadd.f32 %v355, %v359
        %v364 = vadd.f32 %v356, %v360
        %v365 = vadd.f32 %v357, %v361
        %v366 = vadd.f32 %v358, %v362
        %v367 = vld [vmem:[%s1] sm:$0xff]
        %v368 = vld [vmem:[%s1 + $0x8] sm:$0xff]
        %v369 = vld [vmem:[%s1 + $0x10] sm:$0xff]
        %v370 = vld [vmem:[%s1 + $0x18] sm:$0xff]
        %v371 = vld [vmem:[%s1 + $0x20] sm:$0xff]
        %v372 = vld [vmem:[%s1 + $0x28] sm:$0xff]
        %v373 = vld [vmem:[%s1 + $0x30] sm:$0xff]
        %v374 = vld [vmem:[%s1 + $0x38] sm:$0xff]
        %v375 = vld [vmem:[%s1 + $0x40] sm:$0xff]
        %v376 = vld [vmem:[%s1 + $0x48] sm:$0xff]
        %v377 = vld [vmem:[%s1 + $0x50] sm:$0xff]
        %v378 = vld [vmem:[%s1 + $0x58] sm:$0xff]
        %v379 = vld [vmem:[%s1 + $0x60] sm:$0xff]
        %v380 = vld [vmem:[%s1 + $0x68] sm:$0xff]
        %v381 = vld [vmem:[%s1 + $0x70] sm:$0xff]
        %v382 = vld [vmem:[%s1 + $0x78] sm:$0xff]
        %v387 = vrot.slane %v364, 7
        %vm388 = vcmask 1041409
        %v389 = vsel %vm388, %v387, %v363
        %v390 = vrot.slane %v365, 6
        %vm391 = vcmask 1042434
        %v392 = vsel %vm391, %v390, %v389
        %v393 = vrot.slane %v366, 5
        %vm394 = vcmask 1043459
        %v395 = vsel %vm394, %v393, %v392
        %397 = vmatprep.subr.mxu0 0.0
        %398 = vmatpush1.msra.mxu0 %v367
        %399 = vmatprep.subr.mxu0 0.0
        %400 = vmatpush1.msra.mxu0 %v368
        %401 = vmatprep.subr.mxu0 0.0
        %402 = vmatpush1.msra.mxu0 %v369
        %403 = vmatprep.subr.mxu0 0.0
        %404 = vmatpush1.msra.mxu0 %v370
        %405 = vmatprep.subr.mxu0 0.0
        %406 = vmatpush1.msra.mxu0 %v371
        %407 = vmatprep.subr.mxu0 0.0
        %408 = vmatpush1.msra.mxu0 %v372
        %409 = vmatprep.subr.mxu0 0.0
        %410 = vmatpush1.msra.mxu0 %v373
        %411 = vmatprep.subr.mxu0 0.0
        %412 = vmatpush1.msra.mxu0 %v374
        %413 = vmatprep.subr.mxu0 0.0
        %414 = vmatpush1.msra.mxu0 %v375
        %415 = vmatprep.subr.mxu0 0.0
        %416 = vmatpush1.msra.mxu0 %v376
        %417 = vmatprep.subr.mxu0 0.0
        %418 = vmatpush1.msra.mxu0 %v377
        %419 = vmatprep.subr.mxu0 0.0
        %420 = vmatpush1.msra.mxu0 %v378
        %421 = vmatprep.subr.mxu0 0.0
        %422 = vmatpush1.msra.mxu0 %v379
        %423 = vmatprep.subr.mxu0 0.0
        %424 = vmatpush1.msra.mxu0 %v380
        %425 = vmatprep.subr.mxu0 0.0
        %426 = vmatpush1.msra.mxu0 %v381
        %427 = vmatprep.subr.mxu0 0.0
        %428 = vmatpush1.msra.mxu0 %v382
        %429 = vmatprep.subr.mxu0 0.0
        %430 = vmatpush1.msra.mxu0 0.0
        %431 = vmatprep.subr.mxu0 0.0
        %432 = vmatpush1.msra.mxu0 0.0
        %433 = vmatprep.subr.mxu0 0.0
        %434 = vmatpush1.msra.mxu0 0.0
        %435 = vmatprep.subr.mxu0 0.0
        %436 = vmatpush1.msra.mxu0 0.0
        %437 = vmatprep.subr.mxu0 0.0
        %438 = vmatpush1.msra.mxu0 0.0
        %439 = vmatprep.subr.mxu0 0.0
        %440 = vmatpush1.msra.mxu0 0.0
        %441 = vmatprep.subr.mxu0 0.0
        %442 = vmatpush1.msra.mxu0 0.0
        %443 = vmatprep.subr.mxu0 0.0
        %444 = vmatpush1.msra.mxu0 0.0
        %445 = vmatprep.subr.mxu0 0.0
        %446 = vmatpush1.msra.mxu0 0.0
        %447 = vmatprep.subr.mxu0 0.0
        %448 = vmatpush1.msra.mxu0 0.0
        %449 = vmatprep.subr.mxu0 0.0
        %450 = vmatpush1.msra.mxu0 0.0
        %451 = vmatprep.subr.mxu0 0.0
        %452 = vmatpush1.msra.mxu0 0.0
        %453 = vmatprep.subr.mxu0 0.0
        %454 = vmatpush1.msra.mxu0 0.0
        %455 = vmatprep.subr.mxu0 0.0
        %456 = vmatpush1.msra.mxu0 0.0
        %457 = vmatprep.subr.mxu0 0.0
        %458 = vmatpush1.msra.mxu0 0.0
        %459 = vmatprep.subr.mxu0 0.0
        %460 = vmatpush1.msra.mxu0 0.0
        %461 = vmatprep.mubr.f32.mxu0 0.0
        %462 = vmatmul.mubr.f32.gmra.mrb[0].mxu0 %v395
        %v463 = vpop.f32.mrb[0].mxu0
        %v464 = vadd.f32 0.0, %v463
        %v465 = vpop.f32.mrb[0].mxu0
        %466 = vdwg.mxu0
        %v467 = vmul.f32 %v464, 0.015625
        %v468 = vld [vmem:[%s2] sm:$0xff]
        %v469 = vld [vmem:[%s2 + $0x8] sm:$0xff]
        %v470 = vld [vmem:[%s2 + $0x10] sm:$0xff]
        %v471 = vld [vmem:[%s2 + $0x18] sm:$0xff]
        %v472 = vld [vmem:[%s2 + $0x20] sm:$0xff]
        %v473 = vld [vmem:[%s2 + $0x28] sm:$0xff]
        %v474 = vld [vmem:[%s2 + $0x30] sm:$0xff]
        %v475 = vld [vmem:[%s2 + $0x38] sm:$0xff]
        %v476 = vld [vmem:[%s2 + $0x40] sm:$0xff]
        %v477 = vld [vmem:[%s2 + $0x48] sm:$0xff]
        %v478 = vld [vmem:[%s2 + $0x50] sm:$0xff]
        %v479 = vld [vmem:[%s2 + $0x58] sm:$0xff]
        %v480 = vld [vmem:[%s2 + $0x60] sm:$0xff]
        %v481 = vld [vmem:[%s2 + $0x68] sm:$0xff]
        %v482 = vld [vmem:[%s2 + $0x70] sm:$0xff]
        %v483 = vld [vmem:[%s2 + $0x78] sm:$0xff]
        %484 = vmatprep.subr.mxu0 0.0
        %485 = vmatpush1.msra.mxu0 %v468
        %486 = vmatprep.subr.mxu0 0.0
        %487 = vmatpush1.msra.mxu0 %v469
        %488 = vmatprep.subr.mxu0 0.0
        %489 = vmatpush1.msra.mxu0 %v470
        %490 = vmatprep.subr.mxu0 0.0
        %491 = vmatpush1.msra.mxu0 %v471
        %492 = vmatprep.subr.mxu0 0.0
        %493 = vmatpush1.msra.mxu0 %v472
        %494 = vmatprep.subr.mxu0 0.0
        %495 = vmatpush1.msra.mxu0 %v473
        %496 = vmatprep.subr.mxu0 0.0
        %497 = vmatpush1.msra.mxu0 %v474
        %498 = vmatprep.subr.mxu0 0.0
        %499 = vmatpush1.msra.mxu0 %v475
        %500 = vmatprep.subr.mxu0 0.0
        %501 = vmatpush1.msra.mxu0 %v476
        %502 = vmatprep.subr.mxu0 0.0
        %503 = vmatpush1.msra.mxu0 %v477
        %504 = vmatprep.subr.mxu0 0.0
        %505 = vmatpush1.msra.mxu0 %v478
        %506 = vmatprep.subr.mxu0 0.0
        %507 = vmatpush1.msra.mxu0 %v479
        %508 = vmatprep.subr.mxu0 0.0
        %509 = vmatpush1.msra.mxu0 %v480
        %510 = vmatprep.subr.mxu0 0.0
        %511 = vmatpush1.msra.mxu0 %v481
        %512 = vmatprep.subr.mxu0 0.0
        %513 = vmatpush1.msra.mxu0 %v482
        %514 = vmatprep.subr.mxu0 0.0
        %515 = vmatpush1.msra.mxu0 %v483
        %516 = vmatprep.subr.mxu0 0.0
        %517 = vmatpush1.msra.mxu0 0.0
        %518 = vmatprep.subr.mxu0 0.0
        %519 = vmatpush1.msra.mxu0 0.0
        %520 = vmatprep.subr.mxu0 0.0
        %521 = vmatpush1.msra.mxu0 0.0
        %522 = vmatprep.subr.mxu0 0.0
        %523 = vmatpush1.msra.mxu0 0.0
        %524 = vmatprep.subr.mxu0 0.0
        %525 = vmatpush1.msra.mxu0 0.0
        %526 = vmatprep.subr.mxu0 0.0
        %527 = vmatpush1.msra.mxu0 0.0
        %528 = vmatprep.subr.mxu0 0.0
        %529 = vmatpush1.msra.mxu0 0.0
        %530 = vmatprep.subr.mxu0 0.0
        %531 = vmatpush1.msra.mxu0 0.0
        %532 = vmatprep.subr.mxu0 0.0
        %533 = vmatpush1.msra.mxu0 0.0
        %534 = vmatprep.subr.mxu0 0.0
        %535 = vmatpush1.msra.mxu0 0.0
        %536 = vmatprep.subr.mxu0 0.0
        %537 = vmatpush1.msra.mxu0 0.0
        %538 = vmatprep.subr.mxu0 0.0
        %539 = vmatpush1.msra.mxu0 0.0
        %540 = vmatprep.subr.mxu0 0.0
        %541 = vmatpush1.msra.mxu0 0.0
        %542 = vmatprep.subr.mxu0 0.0
        %543 = vmatpush1.msra.mxu0 0.0
        %544 = vmatprep.subr.mxu0 0.0
        %545 = vmatpush1.msra.mxu0 0.0
        %546 = vmatprep.subr.mxu0 0.0
        %547 = vmatpush1.msra.mxu0 0.0
        %548 = vmatprep.mubr.f32.mxu0 0.0
        %549 = vmatmul.mubr.f32.gmra.mrb[0].mxu0 %v395
        %v550 = vpop.f32.mrb[0].mxu0
        %v551 = vadd.f32 0.0, %v550
        %v552 = vpop.f32.mrb[0].mxu0
        %553 = vdwg.mxu0
        %v554 = vmul.f32 %v551, 0.03125
        %vm555 = vcmask 31744
        %v557 = vsel %vm555, %v331, 0
        %vm559 = vcmask 1043456
        %v561 = vsel %vm559, %v467, 0
        %563 = vmatprep.subr.mxu0 0.0
        %564 = vmatpush1.msra.mxu0 %v561
        %565 = vmatprep.subr.mxu0 0.0
        %566 = vmatpush1.msra.mxu0 0.0
        %567 = vmatprep.subr.mxu0 0.0
        %568 = vmatpush1.msra.mxu0 0.0
        %569 = vmatprep.subr.mxu0 0.0
        %570 = vmatpush1.msra.mxu0 0.0
        %571 = vmatprep.subr.mxu0 0.0
        %572 = vmatpush1.msra.mxu0 0.0
        %573 = vmatprep.subr.mxu0 0.0
        %574 = vmatpush1.msra.mxu0 0.0
        %575 = vmatprep.subr.mxu0 0.0
        %576 = vmatpush1.msra.mxu0 0.0
        %577 = vmatprep.subr.mxu0 0.0
        %578 = vmatpush1.msra.mxu0 0.0
        %579 = vmatprep.subr.mxu0 0.0
        %580 = vmatpush1.msra.mxu0 0.0
        %581 = vmatprep.subr.mxu0 0.0
        %582 = vmatpush1.msra.mxu0 0.0
        %583 = vmatprep.subr.mxu0 0.0
        %584 = vmatpush1.msra.mxu0 0.0
        %585 = vmatprep.subr.mxu0 0.0
        %586 = vmatpush1.msra.mxu0 0.0
        %587 = vmatprep.subr.mxu0 0.0
        %588 = vmatpush1.msra.mxu0 0.0
        %589 = vmatprep.subr.mxu0 0.0
        %590 = vmatpush1.msra.mxu0 0.0
        %591 = vmatprep.subr.mxu0 0.0
        %592 = vmatpush1.msra.mxu0 0.0
        %593 = vmatprep.subr.mxu0 0.0
        %594 = vmatpush1.msra.mxu0 0.0
        %595 = vmatprep.subr.mxu0 0.0
        %596 = vmatpush1.msra.mxu0 0.0
        %597 = vmatprep.subr.mxu0 0.0
        %598 = vmatpush1.msra.mxu0 0.0
        %599 = vmatprep.subr.mxu0 0.0
        %600 = vmatpush1.msra.mxu0 0.0
        %601 = vmatprep.subr.mxu0 0.0
        %602 = vmatpush1.msra.mxu0 0.0
        %603 = vmatprep.subr.mxu0 0.0
        %604 = vmatpush1.msra.mxu0 0.0
        %605 = vmatprep.subr.mxu0 0.0
        %606 = vmatpush1.msra.mxu0 0.0
        %607 = vmatprep.subr.mxu0 0.0
        %608 = vmatpush1.msra.mxu0 0.0
        %609 = vmatprep.subr.mxu0 0.0
        %610 = vmatpush1.msra.mxu0 0.0
        %611 = vmatprep.subr.mxu0 0.0
        %612 = vmatpush1.msra.mxu0 0.0
        %613 = vmatprep.subr.mxu0 0.0
        %614 = vmatpush1.msra.mxu0 0.0
        %615 = vmatprep.subr.mxu0 0.0
        %616 = vmatpush1.msra.mxu0 0.0
        %617 = vmatprep.subr.mxu0 0.0
        %618 = vmatpush1.msra.mxu0 0.0
        %619 = vmatprep.subr.mxu0 0.0
        %620 = vmatpush1.msra.mxu0 0.0
        %621 = vmatprep.subr.mxu0 0.0
        %622 = vmatpush1.msra.mxu0 0.0
        %623 = vmatprep.subr.mxu0 0.0
        %624 = vmatpush1.msra.mxu0 0.0
        %625 = vmatprep.subr.mxu0 0.0
        %626 = vmatpush1.msra.mxu0 0.0
        %627 = vmatprep.mubr.f32.mxu0 0.0
        %628 = vmatmul.mubr.f32.gmra.mrb[0].mxu0 %v557
        %v629 = vpop.f32.mrb[0].mxu0
        %v630 = vadd.f32 0.0, %v629
        %v631 = vpop.f32.mrb[0].mxu0
        %632 = vdwg.mxu0
        %v634 = vsel %vm559, %v554, 0
        %636 = vmatprep.subr.mxu0 0.0
        %637 = vmatpush1.msra.mxu0 %v634
        %638 = vmatprep.subr.mxu0 0.0
        %639 = vmatpush1.msra.mxu0 0.0
        %640 = vmatprep.subr.mxu0 0.0
        %641 = vmatpush1.msra.mxu0 0.0
        %642 = vmatprep.subr.mxu0 0.0
        %643 = vmatpush1.msra.mxu0 0.0
        %644 = vmatprep.subr.mxu0 0.0
        %645 = vmatpush1.msra.mxu0 0.0
        %646 = vmatprep.subr.mxu0 0.0
        %647 = vmatpush1.msra.mxu0 0.0
        %648 = vmatprep.subr.mxu0 0.0
        %649 = vmatpush1.msra.mxu0 0.0
        %650 = vmatprep.subr.mxu0 0.0
        %651 = vmatpush1.msra.mxu0 0.0
        %652 = vmatprep.subr.mxu0 0.0
        %653 = vmatpush1.msra.mxu0 0.0
        %654 = vmatprep.subr.mxu0 0.0
        %655 = vmatpush1.msra.mxu0 0.0
        %656 = vmatprep.subr.mxu0 0.0
        %657 = vmatpush1.msra.mxu0 0.0
        %658 = vmatprep.subr.mxu0 0.0
        %659 = vmatpush1.msra.mxu0 0.0
        %660 = vmatprep.subr.mxu0 0.0
        %661 = vmatpush1.msra.mxu0 0.0
        %662 = vmatprep.subr.mxu0 0.0
        %663 = vmatpush1.msra.mxu0 0.0
        %664 = vmatprep.subr.mxu0 0.0
        %665 = vmatpush1.msra.mxu0 0.0
        %666 = vmatprep.subr.mxu0 0.0
        %667 = vmatpush1.msra.mxu0 0.0
        %668 = vmatprep.subr.mxu0 0.0
        %669 = vmatpush1.msra.mxu0 0.0
        %670 = vmatprep.subr.mxu0 0.0
        %671 = vmatpush1.msra.mxu0 0.0
        %672 = vmatprep.subr.mxu0 0.0
        %673 = vmatpush1.msra.mxu0 0.0
        %674 = vmatprep.subr.mxu0 0.0
        %675 = vmatpush1.msra.mxu0 0.0
        %676 = vmatprep.subr.mxu0 0.0
        %677 = vmatpush1.msra.mxu0 0.0
        %678 = vmatprep.subr.mxu0 0.0
        %679 = vmatpush1.msra.mxu0 0.0
        %680 = vmatprep.subr.mxu0 0.0
        %681 = vmatpush1.msra.mxu0 0.0
        %682 = vmatprep.subr.mxu0 0.0
        %683 = vmatpush1.msra.mxu0 0.0
        %684 = vmatprep.subr.mxu0 0.0
        %685 = vmatpush1.msra.mxu0 0.0
        %686 = vmatprep.subr.mxu0 0.0
        %687 = vmatpush1.msra.mxu0 0.0
        %688 = vmatprep.subr.mxu0 0.0
        %689 = vmatpush1.msra.mxu0 0.0
        %690 = vmatprep.subr.mxu0 0.0
        %691 = vmatpush1.msra.mxu0 0.0
        %692 = vmatprep.subr.mxu0 0.0
        %693 = vmatpush1.msra.mxu0 0.0
        %694 = vmatprep.subr.mxu0 0.0
        %695 = vmatpush1.msra.mxu0 0.0
        %696 = vmatprep.subr.mxu0 0.0
        %697 = vmatpush1.msra.mxu0 0.0
        %698 = vmatprep.subr.mxu0 0.0
        %699 = vmatpush1.msra.mxu0 0.0
        %700 = vmatprep.mubr.f32.mxu0 0.0
        %701 = vmatmul.mubr.f32.gmra.mrb[0].mxu0 %v557
        %v702 = vpop.f32.mrb[0].mxu0
        %v703 = vadd.f32 0.0, %v702
        %v704 = vpop.f32.mrb[0].mxu0
        %705 = vdwg.mxu0
        %v706 = vld [vmem:[%s3] sm:$0xff]
        %v707 = vld [vmem:[%s4] sm:$0xff]
        %v708 = vld [vmem:[%s4 + $0x8] sm:$0xff]
        %vm709 = vcmask 130048
        %v711 = vsel %vm709, %v703, 0
        %713 = vmatprep.subr.mxu0 0.0
        %714 = vmatpush1.msra.mxu0 %v707
        %715 = vmatprep.subr.mxu0 0.0
        %716 = vmatpush1.msra.mxu0 %v708
        %717 = vmatprep.subr.mxu0 0.0
        %718 = vmatpush1.msra.mxu0 0.0
        %719 = vmatprep.subr.mxu0 0.0
        %720 = vmatpush1.msra.mxu0 0.0
        %721 = vmatprep.subr.mxu0 0.0
        %722 = vmatpush1.msra.mxu0 0.0
        %723 = vmatprep.subr.mxu0 0.0
        %724 = vmatpush1.msra.mxu0 0.0
        %725 = vmatprep.subr.mxu0 0.0
        %726 = vmatpush1.msra.mxu0 0.0
        %727 = vmatprep.subr.mxu0 0.0
        %728 = vmatpush1.msra.mxu0 0.0
        %729 = vmatprep.subr.mxu0 0.0
        %730 = vmatpush1.msra.mxu0 0.0
        %731 = vmatprep.subr.mxu0 0.0
        %732 = vmatpush1.msra.mxu0 0.0
        %733 = vmatprep.subr.mxu0 0.0
        %734 = vmatpush1.msra.mxu0 0.0
        %735 = vmatprep.subr.mxu0 0.0
        %736 = vmatpush1.msra.mxu0 0.0
        %737 = vmatprep.subr.mxu0 0.0
        %738 = vmatpush1.msra.mxu0 0.0
        %739 = vmatprep.subr.mxu0 0.0
        %740 = vmatpush1.msra.mxu0 0.0
        %741 = vmatprep.subr.mxu0 0.0
        %742 = vmatpush1.msra.mxu0 0.0
        %743 = vmatprep.subr.mxu0 0.0
        %744 = vmatpush1.msra.mxu0 0.0
        %745 = vmatprep.subr.mxu0 0.0
        %746 = vmatpush1.msra.mxu0 0.0
        %747 = vmatprep.subr.mxu0 0.0
        %748 = vmatpush1.msra.mxu0 0.0
        %749 = vmatprep.subr.mxu0 0.0
        %750 = vmatpush1.msra.mxu0 0.0
        %751 = vmatprep.subr.mxu0 0.0
        %752 = vmatpush1.msra.mxu0 0.0
        %753 = vmatprep.subr.mxu0 0.0
        %754 = vmatpush1.msra.mxu0 0.0
        %755 = vmatprep.subr.mxu0 0.0
        %756 = vmatpush1.msra.mxu0 0.0
        %757 = vmatprep.subr.mxu0 0.0
        %758 = vmatpush1.msra.mxu0 0.0
        %759 = vmatprep.subr.mxu0 0.0
        %760 = vmatpush1.msra.mxu0 0.0
        %761 = vmatprep.subr.mxu0 0.0
        %762 = vmatpush1.msra.mxu0 0.0
        %763 = vmatprep.subr.mxu0 0.0
        %764 = vmatpush1.msra.mxu0 0.0
        %765 = vmatprep.subr.mxu0 0.0
        %766 = vmatpush1.msra.mxu0 0.0
        %767 = vmatprep.subr.mxu0 0.0
        %768 = vmatpush1.msra.mxu0 0.0
        %769 = vmatprep.subr.mxu0 0.0
        %770 = vmatpush1.msra.mxu0 0.0
        %771 = vmatprep.subr.mxu0 0.0
        %772 = vmatpush1.msra.mxu0 0.0
        %773 = vmatprep.subr.mxu0 0.0
        %774 = vmatpush1.msra.mxu0 0.0
        %775 = vmatprep.subr.mxu0 0.0
        %776 = vmatpush1.msra.mxu0 0.0
        %777 = vmatprep.mubr.f32.mxu0 0.0
        %778 = vmatmul.mubr.f32.gmra.mrb[0].mxu0 %v711
        %v779 = vpop.f32.mrb[0].mxu0
        %v780 = vadd.f32 0.0, %v779
        %v781 = vpop.f32.mrb[0].mxu0
        %782 = vdwg.mxu0
        %vm783 = vcmask 64512
        %v785 = vsel %vm783, %v630, 0
        %787 = vmatprep.subr.mxu0 0.0
        %788 = vmatpush1.msra.mxu0 %v706
        %789 = vmatprep.subr.mxu0 0.0
        %790 = vmatpush1.msra.mxu0 0.0
        %791 = vmatprep.subr.mxu0 0.0
        %792 = vmatpush1.msra.mxu0 0.0
        %793 = vmatprep.subr.mxu0 0.0
        %794 = vmatpush1.msra.mxu0 0.0
        %795 = vmatprep.subr.mxu0 0.0
        %796 = vmatpush1.msra.mxu0 0.0
        %797 = vmatprep.subr.mxu0 0.0
        %798 = vmatpush1.msra.mxu0 0.0
        %799 = vmatprep.subr.mxu0 0.0
        %800 = vmatpush1.msra.mxu0 0.0
        %801 = vmatprep.subr.mxu0 0.0
        %802 = vmatpush1.msra.mxu0 0.0
        %803 = vmatprep.subr.mxu0 0.0
        %804 = vmatpush1.msra.mxu0 0.0
        %805 = vmatprep.subr.mxu0 0.0
        %806 = vmatpush1.msra.mxu0 0.0
        %807 = vmatprep.subr.mxu0 0.0
        %808 = vmatpush1.msra.mxu0 0.0
        %809 = vmatprep.subr.mxu0 0.0
        %810 = vmatpush1.msra.mxu0 0.0
        %811 = vmatprep.subr.mxu0 0.0
        %812 = vmatpush1.msra.mxu0 0.0
        %813 = vmatprep.subr.mxu0 0.0
        %814 = vmatpush1.msra.mxu0 0.0
        %815 = vmatprep.subr.mxu0 0.0
        %816 = vmatpush1.msra.mxu0 0.0
        %817 = vmatprep.subr.mxu0 0.0
        %818 = vmatpush1.msra.mxu0 0.0
        %819 = vmatprep.subr.mxu0 0.0
        %820 = vmatpush1.msra.mxu0 0.0
        %821 = vmatprep.subr.mxu0 0.0
        %822 = vmatpush1.msra.mxu0 0.0
        %823 = vmatprep.subr.mxu0 0.0
        %824 = vmatpush1.msra.mxu0 0.0
        %825 = vmatprep.subr.mxu0 0.0
        %826 = vmatpush1.msra.mxu0 0.0
        %827 = vmatprep.subr.mxu0 0.0
        %828 = vmatpush1.msra.mxu0 0.0
        %829 = vmatprep.subr.mxu0 0.0
        %830 = vmatpush1.msra.mxu0 0.0
        %831 = vmatprep.subr.mxu0 0.0
        %832 = vmatpush1.msra.mxu0 0.0
        %833 = vmatprep.subr.mxu0 0.0
        %834 = vmatpush1.msra.mxu0 0.0
        %835 = vmatprep.subr.mxu0 0.0
        %836 = vmatpush1.msra.mxu0 0.0
        %837 = vmatprep.subr.mxu0 0.0
        %838 = vmatpush1.msra.mxu0 0.0
        %839 = vmatprep.subr.mxu0 0.0
        %840 = vmatpush1.msra.mxu0 0.0
        %841 = vmatprep.subr.mxu0 0.0
        %842 = vmatpush1.msra.mxu0 0.0
        %843 = vmatprep.subr.mxu0 0.0
        %844 = vmatpush1.msra.mxu0 0.0
        %845 = vmatprep.subr.mxu0 0.0
        %846 = vmatpush1.msra.mxu0 0.0
        %847 = vmatprep.subr.mxu0 0.0
        %848 = vmatpush1.msra.mxu0 0.0
        %849 = vmatprep.subr.mxu0 0.0
        %850 = vmatpush1.msra.mxu0 0.0
        %851 = vmatprep.mubr.f32.mxu0 0.0
        %852 = vmatmul.mubr.f32.gmra.mrb[0].mxu0 %v785
        %v853 = vpop.f32.mrb[0].mxu0
        %v854 = vadd.f32 %v780, %v853
        %v855 = vpop.f32.mrb[0].mxu0
        %856 = vdwg.mxu0
        %858 = vset.pattern.permute.xlu0 0
        %859 = vperm.xlu0 %858, %v333
        %v860 = vpop.permute.xlu0 %859
        %v862 = vadd.f32 %v854, %v860
        %v867 = vrot.slane %v336, 7
        %v868 = vsel %vm388, %v867, %v335
        %v869 = vrot.slane %v337, 6
        %v870 = vsel %vm391, %v869, %v868
        %v871 = vrot.slane %v338, 5
        %v872 = vsel %vm394, %v871, %v870
        %v874 = vsel %vm559, %v872, 0.0
        %875 = vadd.xlane.f32.xlu0 %v874
        %v876 = vpop.xlane.xlu0 %875
        %v877 = vmul.f32 %v876, 0.0078125
        %v879 = vsel %vm559, %v877, 0
        %881 = vmatprep.subr.mxu0 0.0
        %882 = vmatpush1.msra.mxu0 %v879
        %883 = vmatprep.subr.mxu0 0.0
        %884 = vmatpush1.msra.mxu0 0.0
        %885 = vmatprep.subr.mxu0 0.0
        %886 = vmatpush1.msra.mxu0 0.0
        %887 = vmatprep.subr.mxu0 0.0
        %888 = vmatpush1.msra.mxu0 0.0
        %889 = vmatprep.subr.mxu0 0.0
        %890 = vmatpush1.msra.mxu0 0.0
        %891 = vmatprep.subr.mxu0 0.0
        %892 = vmatpush1.msra.mxu0 0.0
        %893 = vmatprep.subr.mxu0 0.0
        %894 = vmatpush1.msra.mxu0 0.0
        %895 = vmatprep.subr.mxu0 0.0
        %896 = vmatpush1.msra.mxu0 0.0
        %897 = vmatprep.subr.mxu0 0.0
        %898 = vmatpush1.msra.mxu0 0.0
        %899 = vmatprep.subr.mxu0 0.0
        %900 = vmatpush1.msra.mxu0 0.0
        %901 = vmatprep.subr.mxu0 0.0
        %902 = vmatpush1.msra.mxu0 0.0
        %903 = vmatprep.subr.mxu0 0.0
        %904 = vmatpush1.msra.mxu0 0.0
        %905 = vmatprep.subr.mxu0 0.0
        %906 = vmatpush1.msra.mxu0 0.0
        %907 = vmatprep.subr.mxu0 0.0
        %908 = vmatpush1.msra.mxu0 0.0
        %909 = vmatprep.subr.mxu0 0.0
        %910 = vmatpush1.msra.mxu0 0.0
        %911 = vmatprep.subr.mxu0 0.0
        %912 = vmatpush1.msra.mxu0 0.0
        %913 = vmatprep.subr.mxu0 0.0
        %914 = vmatpush1.msra.mxu0 0.0
        %915 = vmatprep.subr.mxu0 0.0
        %916 = vmatpush1.msra.mxu0 0.0
        %917 = vmatprep.subr.mxu0 0.0
        %918 = vmatpush1.msra.mxu0 0.0
        %919 = vmatprep.subr.mxu0 0.0
        %920 = vmatpush1.msra.mxu0 0.0
        %921 = vmatprep.subr.mxu0 0.0
        %922 = vmatpush1.msra.mxu0 0.0
        %923 = vmatprep.subr.mxu0 0.0
        %924 = vmatpush1.msra.mxu0 0.0
        %925 = vmatprep.subr.mxu0 0.0
        %926 = vmatpush1.msra.mxu0 0.0
        %927 = vmatprep.subr.mxu0 0.0
        %928 = vmatpush1.msra.mxu0 0.0
        %929 = vmatprep.subr.mxu0 0.0
        %930 = vmatpush1.msra.mxu0 0.0
        %931 = vmatprep.subr.mxu0 0.0
        %932 = vmatpush1.msra.mxu0 0.0
        %933 = vmatprep.subr.mxu0 0.0
        %934 = vmatpush1.msra.mxu0 0.0
        %935 = vmatprep.subr.mxu0 0.0
        %936 = vmatpush1.msra.mxu0 0.0
        %937 = vmatprep.subr.mxu0 0.0
        %938 = vmatpush1.msra.mxu0 0.0
        %939 = vmatprep.subr.mxu0 0.0
        %940 = vmatpush1.msra.mxu0 0.0
        %941 = vmatprep.subr.mxu0 0.0
        %942 = vmatpush1.msra.mxu0 0.0
        %943 = vmatprep.subr.mxu0 0.0
        %944 = vmatpush1.msra.mxu0 0.0
        %945 = vmatprep.mubr.f32.mxu0 0.0
        %946 = vmatmul.mubr.f32.gmra.mrb[0].mxu0 %v557
        %v947 = vpop.f32.mrb[0].mxu0
        %v948 = vadd.f32 0.0, %v947
        %v949 = vpop.f32.mrb[0].mxu0
        %950 = vdwg.mxu0
        %952 = vset.pattern.permute.xlu0 0
        %953 = vperm.xlu0 %952, %v948
        %v954 = vpop.permute.xlu0 %953
        %v956 = vadd.f32 %v954, %v862
        %v957 = vmax.f32 %v956, 0.0
        %959 = vset.pattern.permute.xlu0 0
        %960 = vperm.xlu0 %959, %v334
        %v961 = vpop.permute.xlu0 %960
        %vm963 = vcmask 15360
        %v965 = vsel %vm963, %v332, 0
        %vm967 = vcmask 1041408
        %v969 = vsel %vm967, %v957, 0
        %971 = vmatprep.subr.mxu0 0.0
        %972 = vmatpush1.msra.mxu0 %v969
        %973 = vmatprep.subr.mxu0 0.0
        %974 = vmatpush1.msra.mxu0 0.0
        %975 = vmatprep.subr.mxu0 0.0
        %976 = vmatpush1.msra.mxu0 0.0
        %977 = vmatprep.subr.mxu0 0.0
        %978 = vmatpush1.msra.mxu0 0.0
        %979 = vmatprep.subr.mxu0 0.0
        %980 = vmatpush1.msra.mxu0 0.0
        %981 = vmatprep.subr.mxu0 0.0
        %982 = vmatpush1.msra.mxu0 0.0
        %983 = vmatprep.subr.mxu0 0.0
        %984 = vmatpush1.msra.mxu0 0.0
        %985 = vmatprep.subr.mxu0 0.0
        %986 = vmatpush1.msra.mxu0 0.0
        %987 = vmatprep.subr.mxu0 0.0
        %988 = vmatpush1.msra.mxu0 0.0
        %989 = vmatprep.subr.mxu0 0.0
        %990 = vmatpush1.msra.mxu0 0.0
        %991 = vmatprep.subr.mxu0 0.0
        %992 = vmatpush1.msra.mxu0 0.0
        %993 = vmatprep.subr.mxu0 0.0
        %994 = vmatpush1.msra.mxu0 0.0
        %995 = vmatprep.subr.mxu0 0.0
        %996 = vmatpush1.msra.mxu0 0.0
        %997 = vmatprep.subr.mxu0 0.0
        %998 = vmatpush1.msra.mxu0 0.0
        %999 = vmatprep.subr.mxu0 0.0
        %1000 = vmatpush1.msra.mxu0 0.0
        %1001 = vmatprep.subr.mxu0 0.0
        %1002 = vmatpush1.msra.mxu0 0.0
        %1003 = vmatprep.subr.mxu0 0.0
        %1004 = vmatpush1.msra.mxu0 0.0
        %1005 = vmatprep.subr.mxu0 0.0
        %1006 = vmatpush1.msra.mxu0 0.0
        %1007 = vmatprep.subr.mxu0 0.0
        %1008 = vmatpush1.msra.mxu0 0.0
        %1009 = vmatprep.subr.mxu0 0.0
        %1010 = vmatpush1.msra.mxu0 0.0
        %1011 = vmatprep.subr.mxu0 0.0
        %1012 = vmatpush1.msra.mxu0 0.0
        %1013 = vmatprep.subr.mxu0 0.0
        %1014 = vmatpush1.msra.mxu0 0.0
        %1015 = vmatprep.subr.mxu0 0.0
        %1016 = vmatpush1.msra.mxu0 0.0
        %1017 = vmatprep.subr.mxu0 0.0
        %1018 = vmatpush1.msra.mxu0 0.0
        %1019 = vmatprep.subr.mxu0 0.0
        %1020 = vmatpush1.msra.mxu0 0.0
        %1021 = vmatprep.subr.mxu0 0.0
        %1022 = vmatpush1.msra.mxu0 0.0
        %1023 = vmatprep.subr.mxu0 0.0
        %1024 = vmatpush1.msra.mxu0 0.0
        %1025 = vmatprep.subr.mxu0 0.0
        %1026 = vmatpush1.msra.mxu0 0.0
        %1027 = vmatprep.subr.mxu0 0.0
        %1028 = vmatpush1.msra.mxu0 0.0
        %1029 = vmatprep.subr.mxu0 0.0
        %1030 = vmatpush1.msra.mxu0 0.0
        %1031 = vmatprep.subr.mxu0 0.0
        %1032 = vmatpush1.msra.mxu0 0.0
        %1033 = vmatprep.subr.mxu0 0.0
        %1034 = vmatpush1.msra.mxu0 0.0
        %1035 = vmatprep.mubr.f32.mxu0 0.0
        %1036 = vmatmul.mubr.f32.gmra.mrb[0].mxu0 %v965
        %v1037 = vpop.f32.mrb[0].mxu0
        %v1038 = vadd.f32 %v961, %v1037
        %v1039 = vpop.f32.mrb[0].mxu0
        %1040 = vdwg.mxu0
        %v1041 = vxor.u32 %v1038, 2147483648
        %v1042 = vmul.f32 %v1041, 1.442695
        %v1043 = vpow.pop %v1042
        %v1044 = vadd.f32 %v1043, 1.0
        %v1045 = vrcp.pop %v1044
        %v1046 = vmul.f32 1.0, %v1045
        %v1048 = vrot.slane %v1046, 1
        %v1049 = vrot.slane %v1046, 2
        %v1050 = vrot.slane %v1046, 3
        %v1055 = vmul.f32 %v335, %v1046
        %v1056 = vmul.f32 %v336, %v1048
        %v1057 = vmul.f32 %v337, %v1049
        %v1058 = vmul.f32 %v338, %v1050
        %1059 = vst [vmem:[%s325] sm:$0x1] %v1055
        %1060 = vst [vmem:[%s325 + $0x4] sm:$0x1] %v1056
        %1061 = vst [vmem:[%s325 + $0x8] sm:$0x1] %v1057
        %1062 = vst [vmem:[%s325 + $0xc] sm:$0x1] %v1058
        %v1063 = vld [vmem:[%s330 + $0x1] sm:$0x1]
        %v1064 = vld [vmem:[%s330 + $0x5] sm:$0x1]
        %v1065 = vld [vmem:[%s330 + $0x9] sm:$0x1]
        %v1066 = vld [vmem:[%s330 + $0xd] sm:$0x1]
        %v1071 = vrot.slane %v1064, 7
        %v1072 = vsel %vm388, %v1071, %v1063
        %v1073 = vrot.slane %v1065, 6
        %v1074 = vsel %vm391, %v1073, %v1072
        %v1075 = vrot.slane %v1066, 5
        %v1076 = vsel %vm394, %v1075, %v1074
        %v1078 = vsel %vm559, %v1076, 0.0
        %1079 = vadd.xlane.f32.xlu0 %v1078
        %v1080 = vpop.xlane.xlu0 %1079
        %v1081 = vmul.f32 %v1080, 0.0078125
        %v1083 = vsel %vm559, %v1081, 0
        %1085 = vmatprep.subr.mxu0 0.0
        %1086 = vmatpush1.msra.mxu0 %v1083
        %1087 = vmatprep.subr.mxu0 0.0
        %1088 = vmatpush1.msra.mxu0 0.0
        %1089 = vmatprep.subr.mxu0 0.0
        %1090 = vmatpush1.msra.mxu0 0.0
        %1091 = vmatprep.subr.mxu0 0.0
        %1092 = vmatpush1.msra.mxu0 0.0
        %1093 = vmatprep.subr.mxu0 0.0
        %1094 = vmatpush1.msra.mxu0 0.0
        %1095 = vmatprep.subr.mxu0 0.0
        %1096 = vmatpush1.msra.mxu0 0.0
        %1097 = vmatprep.subr.mxu0 0.0
        %1098 = vmatpush1.msra.mxu0 0.0
        %1099 = vmatprep.subr.mxu0 0.0
        %1100 = vmatpush1.msra.mxu0 0.0
        %1101 = vmatprep.subr.mxu0 0.0
        %1102 = vmatpush1.msra.mxu0 0.0
        %1103 = vmatprep.subr.mxu0 0.0
        %1104 = vmatpush1.msra.mxu0 0.0
        %1105 = vmatprep.subr.mxu0 0.0
        %1106 = vmatpush1.msra.mxu0 0.0
        %1107 = vmatprep.subr.mxu0 0.0
        %1108 = vmatpush1.msra.mxu0 0.0
        %1109 = vmatprep.subr.mxu0 0.0
        %1110 = vmatpush1.msra.mxu0 0.0
        %1111 = vmatprep.subr.mxu0 0.0
        %1112 = vmatpush1.msra.mxu0 0.0
        %1113 = vmatprep.subr.mxu0 0.0
        %1114 = vmatpush1.msra.mxu0 0.0
        %1115 = vmatprep.subr.mxu0 0.0
        %1116 = vmatpush1.msra.mxu0 0.0
        %1117 = vmatprep.subr.mxu0 0.0
        %1118 = vmatpush1.msra.mxu0 0.0
        %1119 = vmatprep.subr.mxu0 0.0
        %1120 = vmatpush1.msra.mxu0 0.0
        %1121 = vmatprep.subr.mxu0 0.0
        %1122 = vmatpush1.msra.mxu0 0.0
        %1123 = vmatprep.subr.mxu0 0.0
        %1124 = vmatpush1.msra.mxu0 0.0
        %1125 = vmatprep.subr.mxu0 0.0
        %1126 = vmatpush1.msra.mxu0 0.0
        %1127 = vmatprep.subr.mxu0 0.0
        %1128 = vmatpush1.msra.mxu0 0.0
        %1129 = vmatprep.subr.mxu0 0.0
        %1130 = vmatpush1.msra.mxu0 0.0
        %1131 = vmatprep.subr.mxu0 0.0
        %1132 = vmatpush1.msra.mxu0 0.0
        %1133 = vmatprep.subr.mxu0 0.0
        %1134 = vmatpush1.msra.mxu0 0.0
        %1135 = vmatprep.subr.mxu0 0.0
        %1136 = vmatpush1.msra.mxu0 0.0
        %1137 = vmatprep.subr.mxu0 0.0
        %1138 = vmatpush1.msra.mxu0 0.0
        %1139 = vmatprep.subr.mxu0 0.0
        %1140 = vmatpush1.msra.mxu0 0.0
        %1141 = vmatprep.subr.mxu0 0.0
        %1142 = vmatpush1.msra.mxu0 0.0
        %1143 = vmatprep.subr.mxu0 0.0
        %1144 = vmatpush1.msra.mxu0 0.0
        %1145 = vmatprep.subr.mxu0 0.0
        %1146 = vmatpush1.msra.mxu0 0.0
        %1147 = vmatprep.subr.mxu0 0.0
        %1148 = vmatpush1.msra.mxu0 0.0
        %1149 = vmatprep.mubr.f32.mxu0 0.0
        %1150 = vmatmul.mubr.f32.gmra.mrb[0].mxu0 %v557
        %v1151 = vpop.f32.mrb[0].mxu0
        %v1152 = vadd.f32 0.0, %v1151
        %v1153 = vpop.f32.mrb[0].mxu0
        %1154 = vdwg.mxu0
        %1156 = vset.pattern.permute.xlu0 0
        %1157 = vperm.xlu0 %1156, %v1152
        %v1158 = vpop.permute.xlu0 %1157
        %v1160 = vadd.f32 %v1158, %v862
        %v1161 = vmax.f32 %v1160, 0.0
        %v1163 = vsel %vm967, %v1161, 0
        %1165 = vmatprep.subr.mxu0 0.0
        %1166 = vmatpush1.msra.mxu0 %v1163
        %1167 = vmatprep.subr.mxu0 0.0
        %1168 = vmatpush1.msra.mxu0 0.0
        %1169 = vmatprep.subr.mxu0 0.0
        %1170 = vmatpush1.msra.mxu0 0.0
        %1171 = vmatprep.subr.mxu0 0.0
        %1172 = vmatpush1.msra.mxu0 0.0
        %1173 = vmatprep.subr.mxu0 0.0
        %1174 = vmatpush1.msra.mxu0 0.0
        %1175 = vmatprep.subr.mxu0 0.0
        %1176 = vmatpush1.msra.mxu0 0.0
        %1177 = vmatprep.subr.mxu0 0.0
        %1178 = vmatpush1.msra.mxu0 0.0
        %1179 = vmatprep.subr.mxu0 0.0
        %1180 = vmatpush1.msra.mxu0 0.0
        %1181 = vmatprep.subr.mxu0 0.0
        %1182 = vmatpush1.msra.mxu0 0.0
        %1183 = vmatprep.subr.mxu0 0.0
        %1184 = vmatpush1.msra.mxu0 0.0
        %1185 = vmatprep.subr.mxu0 0.0
        %1186 = vmatpush1.msra.mxu0 0.0
        %1187 = vmatprep.subr.mxu0 0.0
        %1188 = vmatpush1.msra.mxu0 0.0
        %1189 = vmatprep.subr.mxu0 0.0
        %1190 = vmatpush1.msra.mxu0 0.0
        %1191 = vmatprep.subr.mxu0 0.0
        %1192 = vmatpush1.msra.mxu0 0.0
        %1193 = vmatprep.subr.mxu0 0.0
        %1194 = vmatpush1.msra.mxu0 0.0
        %1195 = vmatprep.subr.mxu0 0.0
        %1196 = vmatpush1.msra.mxu0 0.0
        %1197 = vmatprep.subr.mxu0 0.0
        %1198 = vmatpush1.msra.mxu0 0.0
        %1199 = vmatprep.subr.mxu0 0.0
        %1200 = vmatpush1.msra.mxu0 0.0
        %1201 = vmatprep.subr.mxu0 0.0
        %1202 = vmatpush1.msra.mxu0 0.0
        %1203 = vmatprep.subr.mxu0 0.0
        %1204 = vmatpush1.msra.mxu0 0.0
        %1205 = vmatprep.subr.mxu0 0.0
        %1206 = vmatpush1.msra.mxu0 0.0
        %1207 = vmatprep.subr.mxu0 0.0
        %1208 = vmatpush1.msra.mxu0 0.0
        %1209 = vmatprep.subr.mxu0 0.0
        %1210 = vmatpush1.msra.mxu0 0.0
        %1211 = vmatprep.subr.mxu0 0.0
        %1212 = vmatpush1.msra.mxu0 0.0
        %1213 = vmatprep.subr.mxu0 0.0
        %1214 = vmatpush1.msra.mxu0 0.0
        %1215 = vmatprep.subr.mxu0 0.0
        %1216 = vmatpush1.msra.mxu0 0.0
        %1217 = vmatprep.subr.mxu0 0.0
        %1218 = vmatpush1.msra.mxu0 0.0
        %1219 = vmatprep.subr.mxu0 0.0
        %1220 = vmatpush1.msra.mxu0 0.0
        %1221 = vmatprep.subr.mxu0 0.0
        %1222 = vmatpush1.msra.mxu0 0.0
        %1223 = vmatprep.subr.mxu0 0.0
        %1224 = vmatpush1.msra.mxu0 0.0
        %1225 = vmatprep.subr.mxu0 0.0
        %1226 = vmatpush1.msra.mxu0 0.0
        %1227 = vmatprep.subr.mxu0 0.0
        %1228 = vmatpush1.msra.mxu0 0.0
        %1229 = vmatprep.mubr.f32.mxu0 0.0
        %1230 = vmatmul.mubr.f32.gmra.mrb[0].mxu0 %v965
        %v1231 = vpop.f32.mrb[0].mxu0
        %v1232 = vadd.f32 %v961, %v1231
        %v1233 = vpop.f32.mrb[0].mxu0
        %1234 = vdwg.mxu0
        %v1235 = vxor.u32 %v1232, 2147483648
        %v1236 = vmul.f32 %v1235, 1.442695
        %v1237 = vpow.pop %v1236
        %v1238 = vadd.f32 %v1237, 1.0
        %v1239 = vrcp.pop %v1238
        %v1240 = vmul.f32 1.0, %v1239
        %v1242 = vrot.slane %v1240, 1
        %v1243 = vrot.slane %v1240, 2
        %v1244 = vrot.slane %v1240, 3
        %v1249 = vmul.f32 %v1063, %v1240
        %v1250 = vmul.f32 %v1064, %v1242
        %v1251 = vmul.f32 %v1065, %v1243
        %v1252 = vmul.f32 %v1066, %v1244
        %1253 = vst [vmem:[%s325 + $0x1] sm:$0x1] %v1249
        %1254 = vst [vmem:[%s325 + $0x5] sm:$0x1] %v1250
        %1255 = vst [vmem:[%s325 + $0x9] sm:$0x1] %v1251
        %1256 = vst [vmem:[%s325 + $0xd] sm:$0x1] %v1252
        %v1257 = vld [vmem:[%s330 + $0x2] sm:$0x1]
        %v1258 = vld [vmem:[%s330 + $0x6] sm:$0x1]
        %v1259 = vld [vmem:[%s330 + $0xa] sm:$0x1]
        %v1260 = vld [vmem:[%s330 + $0xe] sm:$0x1]
        %v1265 = vrot.slane %v1258, 7
        %v1266 = vsel %vm388, %v1265, %v1257
        %v1267 = vrot.slane %v1259, 6
        %v1268 = vsel %vm391, %v1267, %v1266
        %v1269 = vrot.slane %v1260, 5
        %v1270 = vsel %vm394, %v1269, %v1268
        %v1272 = vsel %vm559, %v1270, 0.0
        %1273 = vadd.xlane.f32.xlu0 %v1272
        %v1274 = vpop.xlane.xlu0 %1273
        %v1275 = vmul.f32 %v1274, 0.0078125
        %v1277 = vsel %vm559, %v1275, 0
        %1279 = vmatprep.subr.mxu0 0.0
        %1280 = vmatpush1.msra.mxu0 %v1277
        %1281 = vmatprep.subr.mxu0 0.0
        %1282 = vmatpush1.msra.mxu0 0.0
        %1283 = vmatprep.subr.mxu0 0.0
        %1284 = vmatpush1.msra.mxu0 0.0
        %1285 = vmatprep.subr.mxu0 0.0
        %1286 = vmatpush1.msra.mxu0 0.0
        %1287 = vmatprep.subr.mxu0 0.0
        %1288 = vmatpush1.msra.mxu0 0.0
        %1289 = vmatprep.subr.mxu0 0.0
        %1290 = vmatpush1.msra.mxu0 0.0
        %1291 = vmatprep.subr.mxu0 0.0
        %1292 = vmatpush1.msra.mxu0 0.0
        %1293 = vmatprep.subr.mxu0 0.0
        %1294 = vmatpush1.msra.mxu0 0.0
        %1295 = vmatprep.subr.mxu0 0.0
        %1296 = vmatpush1.msra.mxu0 0.0
        %1297 = vmatprep.subr.mxu0 0.0
        %1298 = vmatpush1.msra.mxu0 0.0
        %1299 = vmatprep.subr.mxu0 0.0
        %1300 = vmatpush1.msra.mxu0 0.0
        %1301 = vmatprep.subr.mxu0 0.0
        %1302 = vmatpush1.msra.mxu0 0.0
        %1303 = vmatprep.subr.mxu0 0.0
        %1304 = vmatpush1.msra.mxu0 0.0
        %1305 = vmatprep.subr.mxu0 0.0
        %1306 = vmatpush1.msra.mxu0 0.0
        %1307 = vmatprep.subr.mxu0 0.0
        %1308 = vmatpush1.msra.mxu0 0.0
        %1309 = vmatprep.subr.mxu0 0.0
        %1310 = vmatpush1.msra.mxu0 0.0
        %1311 = vmatprep.subr.mxu0 0.0
        %1312 = vmatpush1.msra.mxu0 0.0
        %1313 = vmatprep.subr.mxu0 0.0
        %1314 = vmatpush1.msra.mxu0 0.0
        %1315 = vmatprep.subr.mxu0 0.0
        %1316 = vmatpush1.msra.mxu0 0.0
        %1317 = vmatprep.subr.mxu0 0.0
        %1318 = vmatpush1.msra.mxu0 0.0
        %1319 = vmatprep.subr.mxu0 0.0
        %1320 = vmatpush1.msra.mxu0 0.0
        %1321 = vmatprep.subr.mxu0 0.0
        %1322 = vmatpush1.msra.mxu0 0.0
        %1323 = vmatprep.subr.mxu0 0.0
        %1324 = vmatpush1.msra.mxu0 0.0
        %1325 = vmatprep.subr.mxu0 0.0
        %1326 = vmatpush1.msra.mxu0 0.0
        %1327 = vmatprep.subr.mxu0 0.0
        %1328 = vmatpush1.msra.mxu0 0.0
        %1329 = vmatprep.subr.mxu0 0.0
        %1330 = vmatpush1.msra.mxu0 0.0
        %1331 = vmatprep.subr.mxu0 0.0
        %1332 = vmatpush1.msra.mxu0 0.0
        %1333 = vmatprep.subr.mxu0 0.0
        %1334 = vmatpush1.msra.mxu0 0.0
        %1335 = vmatprep.subr.mxu0 0.0
        %1336 = vmatpush1.msra.mxu0 0.0
        %1337 = vmatprep.subr.mxu0 0.0
        %1338 = vmatpush1.msra.mxu0 0.0
        %1339 = vmatprep.subr.mxu0 0.0
        %1340 = vmatpush1.msra.mxu0 0.0
        %1341 = vmatprep.subr.mxu0 0.0
        %1342 = vmatpush1.msra.mxu0 0.0
        %1343 = vmatprep.mubr.f32.mxu0 0.0
        %1344 = vmatmul.mubr.f32.gmra.mrb[0].mxu0 %v557
        %v1345 = vpop.f32.mrb[0].mxu0
        %v1346 = vadd.f32 0.0, %v1345
        %v1347 = vpop.f32.mrb[0].mxu0
        %1348 = vdwg.mxu0
        %1350 = vset.pattern.permute.xlu0 0
        %1351 = vperm.xlu0 %1350, %v1346
        %v1352 = vpop.permute.xlu0 %1351
        %v1354 = vadd.f32 %v1352, %v862
        %v1355 = vmax.f32 %v1354, 0.0
        %v1357 = vsel %vm967, %v1355, 0
        %1359 = vmatprep.subr.mxu0 0.0
        %1360 = vmatpush1.msra.mxu0 %v1357
        %1361 = vmatprep.subr.mxu0 0.0
        %1362 = vmatpush1.msra.mxu0 0.0
        %1363 = vmatprep.subr.mxu0 0.0
        %1364 = vmatpush1.msra.mxu0 0.0
        %1365 = vmatprep.subr.mxu0 0.0
        %1366 = vmatpush1.msra.mxu0 0.0
        %1367 = vmatprep.subr.mxu0 0.0
        %1368 = vmatpush1.msra.mxu0 0.0
        %1369 = vmatprep.subr.mxu0 0.0
        %1370 = vmatpush1.msra.mxu0 0.0
        %1371 = vmatprep.subr.mxu0 0.0
        %1372 = vmatpush1.msra.mxu0 0.0
        %1373 = vmatprep.subr.mxu0 0.0
        %1374 = vmatpush1.msra.mxu0 0.0
        %1375 = vmatprep.subr.mxu0 0.0
        %1376 = vmatpush1.msra.mxu0 0.0
        %1377 = vmatprep.subr.mxu0 0.0
        %1378 = vmatpush1.msra.mxu0 0.0
        %1379 = vmatprep.subr.mxu0 0.0
        %1380 = vmatpush1.msra.mxu0 0.0
        %1381 = vmatprep.subr.mxu0 0.0
        %1382 = vmatpush1.msra.mxu0 0.0
        %1383 = vmatprep.subr.mxu0 0.0
        %1384 = vmatpush1.msra.mxu0 0.0
        %1385 = vmatprep.subr.mxu0 0.0
        %1386 = vmatpush1.msra.mxu0 0.0
        %1387 = vmatprep.subr.mxu0 0.0
        %1388 = vmatpush1.msra.mxu0 0.0
        %1389 = vmatprep.subr.mxu0 0.0
        %1390 = vmatpush1.msra.mxu0 0.0
        %1391 = vmatprep.subr.mxu0 0.0
        %1392 = vmatpush1.msra.mxu0 0.0
        %1393 = vmatprep.subr.mxu0 0.0
        %1394 = vmatpush1.msra.mxu0 0.0
        %1395 = vmatprep.subr.mxu0 0.0
        %1396 = vmatpush1.msra.mxu0 0.0
        %1397 = vmatprep.subr.mxu0 0.0
        %1398 = vmatpush1.msra.mxu0 0.0
        %1399 = vmatprep.subr.mxu0 0.0
        %1400 = vmatpush1.msra.mxu0 0.0
        %1401 = vmatprep.subr.mxu0 0.0
        %1402 = vmatpush1.msra.mxu0 0.0
        %1403 = vmatprep.subr.mxu0 0.0
        %1404 = vmatpush1.msra.mxu0 0.0
        %1405 = vmatprep.subr.mxu0 0.0
        %1406 = vmatpush1.msra.mxu0 0.0
        %1407 = vmatprep.subr.mxu0 0.0
        %1408 = vmatpush1.msra.mxu0 0.0
        %1409 = vmatprep.subr.mxu0 0.0
        %1410 = vmatpush1.msra.mxu0 0.0
        %1411 = vmatprep.subr.mxu0 0.0
        %1412 = vmatpush1.msra.mxu0 0.0
        %1413 = vmatprep.subr.mxu0 0.0
        %1414 = vmatpush1.msra.mxu0 0.0
        %1415 = vmatprep.subr.mxu0 0.0
        %1416 = vmatpush1.msra.mxu0 0.0
        %1417 = vmatprep.subr.mxu0 0.0
        %1418 = vmatpush1.msra.mxu0 0.0
        %1419 = vmatprep.subr.mxu0 0.0
        %1420 = vmatpush1.msra.mxu0 0.0
        %1421 = vmatprep.subr.mxu0 0.0
        %1422 = vmatpush1.msra.mxu0 0.0
        %1423 = vmatprep.mubr.f32.mxu0 0.0
        %1424 = vmatmul.mubr.f32.gmra.mrb[0].mxu0 %v965
        %v1425 = vpop.f32.mrb[0].mxu0
        %v1426 = vadd.f32 %v961, %v1425
        %v1427 = vpop.f32.mrb[0].mxu0
        %1428 = vdwg.mxu0
        %v1429 = vxor.u32 %v1426, 2147483648
        %v1430 = vmul.f32 %v1429, 1.442695
        %v1431 = vpow.pop %v1430
        %v1432 = vadd.f32 %v1431, 1.0
        %v1433 = vrcp.pop %v1432
        %v1434 = vmul.f32 1.0, %v1433
        %v1436 = vrot.slane %v1434, 1
        %v1437 = vrot.slane %v1434, 2
        %v1438 = vrot.slane %v1434, 3
        %v1443 = vmul.f32 %v1257, %v1434
        %v1444 = vmul.f32 %v1258, %v1436
        %v1445 = vmul.f32 %v1259, %v1437
        %v1446 = vmul.f32 %v1260, %v1438
        %1447 = vst [vmem:[%s325 + $0x2] sm:$0x1] %v1443
        %1448 = vst [vmem:[%s325 + $0x6] sm:$0x1] %v1444
        %1449 = vst [vmem:[%s325 + $0xa] sm:$0x1] %v1445
        %1450 = vst [vmem:[%s325 + $0xe] sm:$0x1] %v1446
        %v1451 = vld [vmem:[%s330 + $0x3] sm:$0x1]
        %v1452 = vld [vmem:[%s330 + $0x7] sm:$0x1]
        %v1453 = vld [vmem:[%s330 + $0xb] sm:$0x1]
        %v1454 = vld [vmem:[%s330 + $0xf] sm:$0x1]
        %v1459 = vrot.slane %v1452, 7
        %v1460 = vsel %vm388, %v1459, %v1451
        %v1461 = vrot.slane %v1453, 6
        %v1462 = vsel %vm391, %v1461, %v1460
        %v1463 = vrot.slane %v1454, 5
        %v1464 = vsel %vm394, %v1463, %v1462
        %v1466 = vsel %vm559, %v1464, 0.0
        %1467 = vadd.xlane.f32.xlu0 %v1466
        %v1468 = vpop.xlane.xlu0 %1467
        %v1469 = vmul.f32 %v1468, 0.0078125
        %v1471 = vsel %vm559, %v1469, 0
        %1473 = vmatprep.subr.mxu0 0.0
        %1474 = vmatpush1.msra.mxu0 %v1471
        %1475 = vmatprep.subr.mxu0 0.0
        %1476 = vmatpush1.msra.mxu0 0.0
        %1477 = vmatprep.subr.mxu0 0.0
        %1478 = vmatpush1.msra.mxu0 0.0
        %1479 = vmatprep.subr.mxu0 0.0
        %1480 = vmatpush1.msra.mxu0 0.0
        %1481 = vmatprep.subr.mxu0 0.0
        %1482 = vmatpush1.msra.mxu0 0.0
        %1483 = vmatprep.subr.mxu0 0.0
        %1484 = vmatpush1.msra.mxu0 0.0
        %1485 = vmatprep.subr.mxu0 0.0
        %1486 = vmatpush1.msra.mxu0 0.0
        %1487 = vmatprep.subr.mxu0 0.0
        %1488 = vmatpush1.msra.mxu0 0.0
        %1489 = vmatprep.subr.mxu0 0.0
        %1490 = vmatpush1.msra.mxu0 0.0
        %1491 = vmatprep.subr.mxu0 0.0
        %1492 = vmatpush1.msra.mxu0 0.0
        %1493 = vmatprep.subr.mxu0 0.0
        %1494 = vmatpush1.msra.mxu0 0.0
        %1495 = vmatprep.subr.mxu0 0.0
        %1496 = vmatpush1.msra.mxu0 0.0
        %1497 = vmatprep.subr.mxu0 0.0
        %1498 = vmatpush1.msra.mxu0 0.0
        %1499 = vmatprep.subr.mxu0 0.0
        %1500 = vmatpush1.msra.mxu0 0.0
        %1501 = vmatprep.subr.mxu0 0.0
        %1502 = vmatpush1.msra.mxu0 0.0
        %1503 = vmatprep.subr.mxu0 0.0
        %1504 = vmatpush1.msra.mxu0 0.0
        %1505 = vmatprep.subr.mxu0 0.0
        %1506 = vmatpush1.msra.mxu0 0.0
        %1507 = vmatprep.subr.mxu0 0.0
        %1508 = vmatpush1.msra.mxu0 0.0
        %1509 = vmatprep.subr.mxu0 0.0
        %1510 = vmatpush1.msra.mxu0 0.0
        %1511 = vmatprep.subr.mxu0 0.0
        %1512 = vmatpush1.msra.mxu0 0.0
        %1513 = vmatprep.subr.mxu0 0.0
        %1514 = vmatpush1.msra.mxu0 0.0
        %1515 = vmatprep.subr.mxu0 0.0
        %1516 = vmatpush1.msra.mxu0 0.0
        %1517 = vmatprep.subr.mxu0 0.0
        %1518 = vmatpush1.msra.mxu0 0.0
        %1519 = vmatprep.subr.mxu0 0.0
        %1520 = vmatpush1.msra.mxu0 0.0
        %1521 = vmatprep.subr.mxu0 0.0
        %1522 = vmatpush1.msra.mxu0 0.0
        %1523 = vmatprep.subr.mxu0 0.0
        %1524 = vmatpush1.msra.mxu0 0.0
        %1525 = vmatprep.subr.mxu0 0.0
        %1526 = vmatpush1.msra.mxu0 0.0
        %1527 = vmatprep.subr.mxu0 0.0
        %1528 = vmatpush1.msra.mxu0 0.0
        %1529 = vmatprep.subr.mxu0 0.0
        %1530 = vmatpush1.msra.mxu0 0.0
        %1531 = vmatprep.subr.mxu0 0.0
        %1532 = vmatpush1.msra.mxu0 0.0
        %1533 = vmatprep.subr.mxu0 0.0
        %1534 = vmatpush1.msra.mxu0 0.0
        %1535 = vmatprep.subr.mxu0 0.0
        %1536 = vmatpush1.msra.mxu0 0.0
        %1537 = vmatprep.mubr.f32.mxu0 0.0
        %1538 = vmatmul.mubr.f32.gmra.mrb[0].mxu0 %v557
        %v1539 = vpop.f32.mrb[0].mxu0
        %v1540 = vadd.f32 0.0, %v1539
        %v1541 = vpop.f32.mrb[0].mxu0
        %1542 = vdwg.mxu0
        %1544 = vset.pattern.permute.xlu0 0
        %1545 = vperm.xlu0 %1544, %v1540
        %v1546 = vpop.permute.xlu0 %1545
        %v1548 = vadd.f32 %v1546, %v862
        %v1549 = vmax.f32 %v1548, 0.0
        %v1551 = vsel %vm967, %v1549, 0
        %1553 = vmatprep.subr.mxu0 0.0
        %1554 = vmatpush1.msra.mxu0 %v1551
        %1555 = vmatprep.subr.mxu0 0.0
        %1556 = vmatpush1.msra.mxu0 0.0
        %1557 = vmatprep.subr.mxu0 0.0
        %1558 = vmatpush1.msra.mxu0 0.0
        %1559 = vmatprep.subr.mxu0 0.0
        %1560 = vmatpush1.msra.mxu0 0.0
        %1561 = vmatprep.subr.mxu0 0.0
        %1562 = vmatpush1.msra.mxu0 0.0
        %1563 = vmatprep.subr.mxu0 0.0
        %1564 = vmatpush1.msra.mxu0 0.0
        %1565 = vmatprep.subr.mxu0 0.0
        %1566 = vmatpush1.msra.mxu0 0.0
        %1567 = vmatprep.subr.mxu0 0.0
        %1568 = vmatpush1.msra.mxu0 0.0
        %1569 = vmatprep.subr.mxu0 0.0
        %1570 = vmatpush1.msra.mxu0 0.0
        %1571 = vmatprep.subr.mxu0 0.0
        %1572 = vmatpush1.msra.mxu0 0.0
        %1573 = vmatprep.subr.mxu0 0.0
        %1574 = vmatpush1.msra.mxu0 0.0
        %1575 = vmatprep.subr.mxu0 0.0
        %1576 = vmatpush1.msra.mxu0 0.0
        %1577 = vmatprep.subr.mxu0 0.0
        %1578 = vmatpush1.msra.mxu0 0.0
        %1579 = vmatprep.subr.mxu0 0.0
        %1580 = vmatpush1.msra.mxu0 0.0
        %1581 = vmatprep.subr.mxu0 0.0
        %1582 = vmatpush1.msra.mxu0 0.0
        %1583 = vmatprep.subr.mxu0 0.0
        %1584 = vmatpush1.msra.mxu0 0.0
        %1585 = vmatprep.subr.mxu0 0.0
        %1586 = vmatpush1.msra.mxu0 0.0
        %1587 = vmatprep.subr.mxu0 0.0
        %1588 = vmatpush1.msra.mxu0 0.0
        %1589 = vmatprep.subr.mxu0 0.0
        %1590 = vmatpush1.msra.mxu0 0.0
        %1591 = vmatprep.subr.mxu0 0.0
        %1592 = vmatpush1.msra.mxu0 0.0
        %1593 = vmatprep.subr.mxu0 0.0
        %1594 = vmatpush1.msra.mxu0 0.0
        %1595 = vmatprep.subr.mxu0 0.0
        %1596 = vmatpush1.msra.mxu0 0.0
        %1597 = vmatprep.subr.mxu0 0.0
        %1598 = vmatpush1.msra.mxu0 0.0
        %1599 = vmatprep.subr.mxu0 0.0
        %1600 = vmatpush1.msra.mxu0 0.0
        %1601 = vmatprep.subr.mxu0 0.0
        %1602 = vmatpush1.msra.mxu0 0.0
        %1603 = vmatprep.subr.mxu0 0.0
        %1604 = vmatpush1.msra.mxu0 0.0
        %1605 = vmatprep.subr.mxu0 0.0
        %1606 = vmatpush1.msra.mxu0 0.0
        %1607 = vmatprep.subr.mxu0 0.0
        %1608 = vmatpush1.msra.mxu0 0.0
        %1609 = vmatprep.subr.mxu0 0.0
        %1610 = vmatpush1.msra.mxu0 0.0
        %1611 = vmatprep.subr.mxu0 0.0
        %1612 = vmatpush1.msra.mxu0 0.0
        %1613 = vmatprep.subr.mxu0 0.0
        %1614 = vmatpush1.msra.mxu0 0.0
        %1615 = vmatprep.subr.mxu0 0.0
        %1616 = vmatpush1.msra.mxu0 0.0
        %1617 = vmatprep.mubr.f32.mxu0 0.0
        %1618 = vmatmul.mubr.f32.gmra.mrb[0].mxu0 %v965
        %v1619 = vpop.f32.mrb[0].mxu0
        %v1620 = vadd.f32 %v961, %v1619
        %v1621 = vpop.f32.mrb[0].mxu0
        %1622 = vdwg.mxu0
        %v1623 = vxor.u32 %v1620, 2147483648
        %v1624 = vmul.f32 %v1623, 1.442695
        %v1625 = vpow.pop %v1624
        %v1626 = vadd.f32 %v1625, 1.0
        %v1627 = vrcp.pop %v1626
        %v1628 = vmul.f32 1.0, %v1627
        %v1630 = vrot.slane %v1628, 1
        %v1631 = vrot.slane %v1628, 2
        %v1632 = vrot.slane %v1628, 3
        %v1637 = vmul.f32 %v1451, %v1628
        %v1638 = vmul.f32 %v1452, %v1630
        %v1639 = vmul.f32 %v1453, %v1631
        %v1640 = vmul.f32 %v1454, %v1632
        %1641 = vst [vmem:[%s325 + $0x3] sm:$0x1] %v1637
        %1642 = vst [vmem:[%s325 + $0x7] sm:$0x1] %v1638
        %1643 = vst [vmem:[%s325 + $0xb] sm:$0x1] %v1639
        %1644 = vst [vmem:[%s325 + $0xf] sm:$0x1] %v1640
        %s1645 = sand.u32 %s225, 1
        %s1646 = scalar_lea.sflag [#allocation3], %s1645
        %s1647 = sand.u32 %s225, 1
        %s1648 = smul.addr %s1647, 16
        %s1649 = scalar_lea.vmem [#allocation2], %s1648
        // Predicated region
        $region57: #{tpu_custom_call.1} parent=55 // pred_check
          %p1650 = pneg %p235
        $region58: #{tpu_custom_call.1} parent=55 // pred_check_branch
          %1652 = sbr.rel (%p1650) target = $region60
        $region59: #{tpu_custom_call.1} parent=55 // pred_region
          %s1654 = ssub.s32 256, 256
          %1655 = vsyncadd %s1646, %s1654
          %s1656 = smul.addr %s23, 4
          %s1657 = smul.addr %s1656, 64
          %s1658 = scalar_lea.hbm %s9, %s1657
          %s1659 = sshll.u32 %s1649, 4
          %s1660 = int_to_ptr.vmem [resolvable:$true] %s1659
          %1665 = dma.vmem_to_hbm [thread:$0]  %s1660, 256, %s1658, %s1646, 64, 64, 4
        $region60: #{tpu_custom_call.1} parent=55 // pred_fallthru
          _
      $region56: #{tpu_custom_call.1} parent=5 // pred_fallthru
        _
      %p1666 = scmp.le.s32.totalorder 2, %s18
      // Predicated region
      $region61: #{tpu_custom_call.1} parent=5 // pred_check
        %p1667 = pneg %p1666
      $region62: #{tpu_custom_call.1} parent=5 // pred_check_branch
        %1669 = sbr.rel (%p1667) target = $region64
      $region63: #{tpu_custom_call.1} parent=5 // pred_region
        %s1670 = ssub.s32 %s18, 2
        // Predicated region
        $region65: #{tpu_custom_call.1} parent=63 // pred_check
          %p1671 = pneg %p241
        $region66: #{tpu_custom_call.1} parent=63 // pred_check_branch
          %1673 = sbr.rel (%p1671) target = $region68
        $region67: #{tpu_custom_call.1} parent=63 // pred_region
          %s1674 = sand.u32 %s226, 1
          %s1675 = scalar_lea.sflag [#allocation3], %s1674
          %s1676 = sand.u32 %s226, 1
          %s1677 = smul.addr %s1676, 16
          %s1678 = scalar_lea.vmem [#allocation2], %s1677
          %1679 = dma.done %s1675, 256
        $region68: #{tpu_custom_call.1} parent=63 // pred_fallthru
          _
      $region64: #{tpu_custom_call.1} parent=5 // pred_fallthru
        _
    $region6: #{tpu_custom_call.1} parent=1 // loop_footer
      %s22 = sadd.s32 1, %s18
    $region7: #{tpu_custom_call.1} parent=1 // loop_footer_branch
      %17 = sbr.rel target = $region3
    $region8: #{tpu_custom_call.1} parent=1 // loop_exit
      _
    %1680 = vsyncpa [#allocation3], 1
    %s1681 = scalar_lea.sflag [#allocation3], 1
    %1682 = vsyncpa %s1681, 1

</llo_original>
